<compile_context>
chip_gen: v6e
topology: v6e:2x2x1
jax: 0.10.0
libtpu: 0.0.40
codegen_flags: <defaults>
</compile_context>

<pallas_src>
import functools

import numpy as np
import jax
import jax.numpy as jnp
from jax.experimental import pallas as pl
from jax.experimental.pallas import tpu as pltpu


# ---------------- model constants (fixed by the PyTorch spec) ----------------
K = 5                               # conv kernel size
C0, C1, C2 = 1, 10, 20              # channels
H0 = W0 = 28                        # input spatial (required by fc1 = Linear(320, 50))
H1 = W1 = H0 - K + 1                # 24  conv1 out
H1P = W1P = H1 // 2                 # 12  pool1 out
H2 = W2 = H1P - K + 1               # 8   conv2 out
H2P = W2P = H2 // 2                 # 4   pool2 out
FC1_IN = C2 * H2P * W2P             # 320
FC1_OUT = 50
FC1_PAD = 64                        # fc1 output padded for lane density
FC2_OUT = 10
OUT_PAD = 128                       # logits padded to a full 128-lane store

LANES1 = W1P * C1                   # 120 : pooled conv1 lanes, layout (j1, c1)
LANES2 = W2P * C2                   # 80  : pooled conv2 lanes, layout (j2, c2)


# ------------------------------- Pallas kernel -------------------------------
def _cnn_kernel(x_ref, w1_ref, b1_ref, w2_ref, b2_ref,
                wf1_ref, bf1_ref, wf2_ref, bf2_ref, o_ref):
    """Fused forward for one batch block of B images.

    Slab layouts (rows always contain the batch):
      x_ref  : (2, B*12, 140) bf16, plane a = conv1 output-row parity,
               row b*12+rh = image row 2*rh + a + kh (kh folded into 140 lanes).
      conv1  : (B*12, 240) f32 per parity, lanes = (col-parity, j1, c1).
      p1     : (B*12, 120)           lanes = (j1, c1)          -- pooled conv1.
      conv2  : (B*12-5, 160) per parity, lanes = (col-parity, j2, c2).
      p2     : (B*12-5, 80)          lanes = (j2, c2), valid at rows b*12 + 2*rh2.
      logits : (B*12, 128) f32, valid at rows b*12, cols :10.
    """
    R = x_ref.shape[1]                                        # B * 12

    # ---- conv1: one K=140 matmul per output-row parity ----
    a0 = jnp.dot(x_ref[0], w1_ref[...], preferred_element_type=jnp.float32)
    a1 = jnp.dot(x_ref[1], w1_ref[...], preferred_element_type=jnp.float32)
    # 2x2 max-pool: height pair = the two parities, width pair = the two lane halves.
    m1 = jnp.maximum(jnp.maximum(a0[:, :LANES1], a0[:, LANES1:]),
                     jnp.maximum(a1[:, :LANES1], a1[:, LANES1:]))
    # bias + ReLU after the max is equivalent (bias constant over the pool window).
    p1 = jnp.maximum(m1 + b1_ref[...], 0.0)                   # (R, 120) f32
    p1b = p1.astype(jnp.bfloat16)                             # cast once

    # ---- conv2: global-row-shift formulation, one K=600 matmul per parity ----
    L2 = R - 5
    c_par = []
    for p2 in range(2):
        xs = jnp.concatenate(
            [p1b[p2 + kh: p2 + kh + L2, :] for kh in range(K)], axis=1)   # (L2, 600)
        c_par.append(jnp.dot(xs, w2_ref[...], preferred_element_type=jnp.float32))
    m2 = jnp.maximum(jnp.maximum(c_par[0][:, :LANES2], c_par[0][:, LANES2:]),
                     jnp.maximum(c_par[1][:, :LANES2], c_par[1][:, LANES2:]))
    p2v = jnp.maximum(m2 + b2_ref[...], 0.0)                  # (L2, 80)
    # TODO(synk): nn.Dropout2d treated as identity (inference/eval mode).
    p2b = p2v.astype(jnp.bfloat16)

    # ---- fc1 (320 -> 50, padded to 64 lanes): one K=320 matmul ----
    L3 = R - 11
    xf = jnp.concatenate(
        [p2b[2 * r: 2 * r + L3, :] for r in range(H2P)], axis=1)          # (L3, 320)
    f1 = jnp.dot(xf, wf1_ref[...], preferred_element_type=jnp.float32)
    f1 = jnp.maximum(f1 + bf1_ref[...], 0.0)                  # (L3, 64)

    # ---- fc2 (50 -> 10, padded to 128 output lanes) + ReLU ----
    g = jnp.dot(f1.astype(jnp.bfloat16), wf2_ref[...],
                preferred_element_type=jnp.float32)
    g = jnp.maximum(g + bf2_ref[...], 0.0)                    # (L3, 128)

    # Lane-dense batched output store; rows L3..R-1 are padding.
    o_ref[...] = jnp.concatenate(
        [g, jnp.zeros((R - L3, OUT_PAD), jnp.float32)], axis=0)


# --------------------- host-side weight layout preparation -------------------
def _conv1_weight(w):
    """Torch (10,1,5,5) -> (140, 240) banded bf16 weight.
    rows = (kh, w_in); cols = (col-parity cp, j1, c1) with ow = 2*j1 + cp."""
    w = np.asarray(w, np.float32)
    out = np.zeros((K, W0, 2 * LANES1), np.float32)
    for kh in range(K):
        for ow in range(W1):
            cp, j = ow % 2, ow // 2
            col = cp * LANES1 + j * C1
            for kw in range(K):
                out[kh, ow + kw, col:col + C1] = w[:, 0, kh, kw]
    return jnp.asarray(out.reshape(K * W0, 2 * LANES1), jnp.bfloat16)


def _conv2_weight(w):
    """Torch (20,10,5,5) -> (600, 160) banded bf16 weight.
    rows = (kh, j_in, c_in); cols = (cp, j2, c_out) with ow2 = 2*j2 + cp."""
    w = np.asarray(w, np.float32)
    out = np.zeros((K, LANES1, 2 * LANES2), np.float32)
    for kh in range(K):
        for ow in range(W2):
            cp, j2 = ow % 2, ow // 2
            col = cp * LANES2 + j2 * C2
            for kw in range(K):
                j_in = ow + kw
                for ci in range(C1):
                    out[kh, j_in * C1 + ci, col:col + C2] = w[:, ci, kh, kw]
    return jnp.asarray(out.reshape(K * LANES1, 2 * LANES2), jnp.bfloat16)


def _fc1_weight(w):
    """Torch (50, 320) (flatten idx = c*16 + rh*4 + j) -> (320, 64) bf16.
    rows = (rh2, j2, c2); cols padded 50 -> 64."""
    w = np.asarray(w, np.float32)
    out = np.zeros((H2P, LANES2, FC1_PAD), np.float32)
    for rh in range(H2P):
        for j in range(W2P):
            for c in range(C2):
                out[rh, j * C2 + c, :FC1_OUT] = w[:, c * (H2P * W2P) + rh * W2P + j]
    return jnp.asarray(out.reshape(H2P * LANES2, FC1_PAD), jnp.bfloat16)


def prepare_params(p):
    """Torch-layout params -> kernel-ready params (banded layout, padding, bf16)."""
    b1 = jnp.tile(p["conv1_b"], W1P).reshape(1, LANES1).astype(jnp.float32)
    b2 = jnp.tile(p["conv2_b"], W2P).reshape(1, LANES2).astype(jnp.float32)
    bf1 = jnp.pad(p["fc1_b"], (0, FC1_PAD - FC1_OUT)).reshape(1, FC1_PAD).astype(jnp.float32)
    wf2 = np.zeros((FC1_PAD, OUT_PAD), np.float32)
    wf2[:FC1_OUT, :FC2_OUT] = np.asarray(p["fc2_w"], np.float32).T
    bf2 = np.zeros((1, OUT_PAD), np.float32)
    bf2[0, :FC2_OUT] = np.asarray(p["fc2_b"], np.float32)
    return dict(
        w1=_conv1_weight(p["conv1_w"]), b1=b1,
        w2=_conv2_weight(p["conv2_w"]), b2=b2,
        wf1=_fc1_weight(p["fc1_w"]), bf1=bf1,
        wf2=jnp.asarray(wf2, jnp.bfloat16), bf2=jnp.asarray(bf2, jnp.float32))


def init_params(key):
    ks = jax.random.split(key, 8)
    s = 0.1
    return {
        "conv1_w": s * jax.random.normal(ks[0], (C1, C0, K, K), jnp.float32),
        "conv1_b": s * jax.random.normal(ks[1], (C1,), jnp.float32),
        "conv2_w": s * jax.random.normal(ks[2], (C2, C1, K, K), jnp.float32),
        "conv2_b": s * jax.random.normal(ks[3], (C2,), jnp.float32),
        "fc1_w": s * jax.random.normal(ks[4], (FC1_OUT, FC1_IN), jnp.float32),
        "fc1_b": s * jax.random.normal(ks[5], (FC1_OUT,), jnp.float32),
        "fc2_w": s * jax.random.normal(ks[6], (FC2_OUT, FC1_OUT), jnp.float32),
        "fc2_b": s * jax.random.normal(ks[7], (FC2_OUT,), jnp.float32),
    }


# ----------------------------------- forward ---------------------------------
def cnn_forward(x_nchw, kp, *, block_b=64):
    """x_nchw: (N, 1, 28, 28) float32 -> (N, 10) float32."""
    n = x_nchw.shape[0]
    bb = min(block_b, max(n, 2))
    if bb % 2:                                   # keep rows (= bb*12) a multiple of 8
        bb += 1
    n_pad = ((n + bb - 1) // bb) * bb

    x = x_nchw[:, 0, :, :].astype(jnp.bfloat16)  # bf16 images: half the input DMA
    if n_pad != n:
        x = jnp.pad(x, ((0, n_pad - n), (0, 0), (0, 0)))

    # Pre-shift conv1 input rows in XLA (tiny, one-time): plane a = output-row parity,
    # lane layout (kh, w); row b*12 + rh holds image row 2*rh + a + kh.
    planes = []
    for a in range(2):
        sh = jnp.concatenate(
            [x[:, a + kh: a + kh + H1: 2, :] for kh in range(K)], axis=2)  # (n_pad,12,140)
        planes.append(sh.reshape(n_pad * H1P, K * W0))
    x1 = jnp.stack(planes, axis=0)               # (2, n_pad*12, 140) bf16

    rows = bb * H1P
    out = pl.pallas_call(
        _cnn_kernel,
        out_shape=jax.ShapeDtypeStruct((n_pad * H1P, OUT_PAD), jnp.float32),
        grid=(n_pad // bb,),
        in_specs=[
            pl.BlockSpec((2, rows, K * W0), lambda i: (0, i, 0)),          # images
            pl.BlockSpec((K * W0, 2 * LANES1), lambda i: (0, 0)),          # conv1 W
            pl.BlockSpec((1, LANES1), lambda i: (0, 0)),                   # conv1 b
            pl.BlockSpec((K * LANES1, 2 * LANES2), lambda i: (0, 0)),      # conv2 W
            pl.BlockSpec((1, LANES2), lambda i: (0, 0)),                   # conv2 b
            pl.BlockSpec((H2P * LANES2, FC1_PAD), lambda i: (0, 0)),       # fc1 W
            pl.BlockSpec((1, FC1_PAD), lambda i: (0, 0)),                  # fc1 b
            pl.BlockSpec((FC1_PAD, OUT_PAD), lambda i: (0, 0)),            # fc2 W
            pl.BlockSpec((1, OUT_PAD), lambda i: (0, 0)),                  # fc2 b
        ],
        out_specs=pl.BlockSpec((rows, OUT_PAD), lambda i: (i, 0)),
        compiler_params=pltpu.CompilerParams(
            dimension_semantics=("parallel",)),
    )(x1, kp["w1"], kp["b1"], kp["w2"], kp["b2"],
      kp["wf1"], kp["bf1"], kp["wf2"], kp["bf2"])

    # Valid logits live on row 12*b, lanes :10.
    return out.reshape(n_pad, H1P, OUT_PAD)[:n, 0, :FC2_OUT]


# ------------------------------ pure-JAX reference ----------------------------
def _pool2x2(x):
    n, c, h, w = x.shape
    return x.reshape(n, c, h // 2, 2, w // 2, 2).max(axis=(3, 5))


def cnn_reference(x, p):
    dn = ("NCHW", "OIHW", "NCHW")
    y = jax.lax.conv_general_dilated(x, p["conv1_w"], (1, 1), "VALID", dimension_numbers=dn)
    y = jax.nn.relu(y + p["conv1_b"][None, :, None, None])
    y = _pool2x2(y)
    y = jax.lax.conv_general_dilated(y, p["conv2_w"], (1, 1), "VALID", dimension_numbers=dn)
    y = jax.nn.relu(y + p["conv2_b"][None, :, None, None])
    y = _pool2x2(y)                              # Dropout2d -> identity (eval mode)
    y = y.reshape(y.shape[0], -1)
    y = jax.nn.relu(y @ p["fc1_w"].T + p["fc1_b"])
    y = jax.nn.relu(y @ p["fc2_w"].T + p["fc2_b"])
    return y


if __name__ == "__main__":
    key = jax.random.PRNGKey(0)
    k_params, k_x = jax.random.split(key)
    torch_params = init_params(k_params)
    kparams = prepare_params(torch_params)

    # batch=8, 1 channel, 28x28 spatial (required by fc1 = Linear(20*4*4, 50));
    # block_b=4 -> 2 grid steps.
    n = 8
    x = jax.random.normal(k_x, (n, 1, H0, W0), jnp.float32)

    fwd = jax.jit(functools.partial(cnn_forward, block_b=4))
    out = jax.block_until_ready(fwd(x, kparams))
    assert out.shape == (n, FC2_OUT)
    assert out.dtype == jnp.float32

    # bf16 matmul inputs (f32 accumulation) -> ~1e-2-level drift vs the f32 reference.
    ref = cnn_reference(x, torch_params)
    ok = jnp.all(jnp.abs(out - ref) <= 0.05 + 0.05 * jnp.abs(ref))
    assert bool(ok), f"mismatch vs reference, max abs err = {float(jnp.max(jnp.abs(out - ref)))}"

    print("KERNEL_OK")
</pallas_src>

<mosaic_0001>
module attributes {stable_mosaic.version = 11 : i64} {
  func.func @_cnn_kernel(%arg0: i32, %arg1: memref<2x48x140xbf16, #tpu.memory_space<vmem>>, %arg2: memref<140x240xbf16, #tpu.memory_space<vmem>>, %arg3: memref<1x120xf32, #tpu.memory_space<vmem>>, %arg4: memref<600x160xbf16, #tpu.memory_space<vmem>>, %arg5: memref<1x80xf32, #tpu.memory_space<vmem>>, %arg6: memref<320x64xbf16, #tpu.memory_space<vmem>>, %arg7: memref<1x64xf32, #tpu.memory_space<vmem>>, %arg8: memref<64x128xbf16, #tpu.memory_space<vmem>>, %arg9: memref<1x128xf32, #tpu.memory_space<vmem>>, %arg10: memref<48x128xf32, #tpu.memory_space<vmem>>) attributes {dimension_semantics = [#tpu.dimension_semantics<parallel>], iteration_bounds = array<i64: 2>, scalar_prefetch = 0 : i64, scratch_operands = 0 : i64, tpu.core_type = #tpu.core_type<tc>, window_params = [{transform_indices = @transform_0, window_bounds = array<i64: 2, 48, 140>}, {pipeline_mode = #tpu.pipeline_mode<synchronous>, transform_indices = @transform_1, window_bounds = array<i64: 140, 240>}, {pipeline_mode = #tpu.pipeline_mode<synchronous>, transform_indices = @transform_2, window_bounds = array<i64: 1, 120>}, {pipeline_mode = #tpu.pipeline_mode<synchronous>, transform_indices = @transform_3, window_bounds = array<i64: 600, 160>}, {pipeline_mode = #tpu.pipeline_mode<synchronous>, transform_indices = @transform_4, window_bounds = array<i64: 1, 80>}, {pipeline_mode = #tpu.pipeline_mode<synchronous>, transform_indices = @transform_5, window_bounds = array<i64: 320, 64>}, {pipeline_mode = #tpu.pipeline_mode<synchronous>, transform_indices = @transform_6, window_bounds = array<i64: 1, 64>}, {pipeline_mode = #tpu.pipeline_mode<synchronous>, transform_indices = @transform_7, window_bounds = array<i64: 64, 128>}, {pipeline_mode = #tpu.pipeline_mode<synchronous>, transform_indices = @transform_8, window_bounds = array<i64: 1, 128>}, {transform_indices = @transform_9, window_bounds = array<i64: 48, 128>}]} {
    %c0 = arith.constant 0 : index
    %c0_0 = arith.constant 0 : index
    %c0_1 = arith.constant 0 : index
    %0 = vector.load %arg1[%c0, %c0_0, %c0_1] : memref<2x48x140xbf16, #tpu.memory_space<vmem>>, vector<1x48x140xbf16>
    %1 = vector.shape_cast %0 : vector<1x48x140xbf16> to vector<48x140xbf16>
    %c0_2 = arith.constant 0 : index
    %c0_3 = arith.constant 0 : index
    %2 = vector.load %arg2[%c0_2, %c0_3] : memref<140x240xbf16, #tpu.memory_space<vmem>>, vector<140x240xbf16>
    %cst = arith.constant dense<0.000000e+00> : vector<48x240xf32>
    %3 = tpu.matmul %1, %2, %cst {dimension_numbers = #tpu.dot_dimension_numbers<[1], [0], [0], [1], [0, 0, 1, 1], [], []>} : vector<48x140xbf16>, vector<140x240xbf16>, vector<48x240xf32> -> vector<48x240xf32>
    %c1 = arith.constant 1 : index
    %c0_4 = arith.constant 0 : index
    %c0_5 = arith.constant 0 : index
    %4 = vector.load %arg1[%c1, %c0_4, %c0_5] : memref<2x48x140xbf16, #tpu.memory_space<vmem>>, vector<1x48x140xbf16>
    %5 = vector.shape_cast %4 : vector<1x48x140xbf16> to vector<48x140xbf16>
    %c0_6 = arith.constant 0 : index
    %c0_7 = arith.constant 0 : index
    %6 = vector.load %arg2[%c0_6, %c0_7] : memref<140x240xbf16, #tpu.memory_space<vmem>>, vector<140x240xbf16>
    %cst_8 = arith.constant dense<0.000000e+00> : vector<48x240xf32>
    %7 = tpu.matmul %5, %6, %cst_8 {dimension_numbers = #tpu.dot_dimension_numbers<[1], [0], [0], [1], [0, 0, 1, 1], [], []>} : vector<48x140xbf16>, vector<140x240xbf16>, vector<48x240xf32> -> vector<48x240xf32>
    %8 = vector.extract_strided_slice %3 {offsets = [0, 0], sizes = [48, 120], strides = [1, 1]} : vector<48x240xf32> to vector<48x120xf32>
    %9 = vector.extract_strided_slice %3 {offsets = [0, 120], sizes = [48, 120], strides = [1, 1]} : vector<48x240xf32> to vector<48x120xf32>
    %10 = arith.maximumf %8, %9 : vector<48x120xf32>
    %11 = vector.extract_strided_slice %7 {offsets = [0, 0], sizes = [48, 120], strides = [1, 1]} : vector<48x240xf32> to vector<48x120xf32>
    %12 = vector.extract_strided_slice %7 {offsets = [0, 120], sizes = [48, 120], strides = [1, 1]} : vector<48x240xf32> to vector<48x120xf32>
    %13 = arith.maximumf %11, %12 : vector<48x120xf32>
    %14 = arith.maximumf %10, %13 : vector<48x120xf32>
    %c0_9 = arith.constant 0 : index
    %c0_10 = arith.constant 0 : index
    %15 = vector.load %arg3[%c0_9, %c0_10] : memref<1x120xf32, #tpu.memory_space<vmem>>, vector<1x120xf32>
    %16 = vector.broadcast %15 : vector<1x120xf32> to vector<48x120xf32>
    %17 = arith.addf %14, %16 : vector<48x120xf32>
    %cst_11 = arith.constant 0.000000e+00 : f32
    %18 = vector.broadcast %cst_11 : f32 to vector<48x120xf32>
    %19 = arith.maximumf %17, %18 : vector<48x120xf32>
    %20 = arith.truncf %19 : vector<48x120xf32> to vector<48x120xbf16>
    %21 = vector.extract_strided_slice %20 {offsets = [0, 0], sizes = [43, 120], strides = [1, 1]} : vector<48x120xbf16> to vector<43x120xbf16>
    %22 = vector.extract_strided_slice %20 {offsets = [1, 0], sizes = [43, 120], strides = [1, 1]} : vector<48x120xbf16> to vector<43x120xbf16>
    %23 = vector.extract_strided_slice %20 {offsets = [2, 0], sizes = [43, 120], strides = [1, 1]} : vector<48x120xbf16> to vector<43x120xbf16>
    %24 = vector.extract_strided_slice %20 {offsets = [3, 0], sizes = [43, 120], strides = [1, 1]} : vector<48x120xbf16> to vector<43x120xbf16>
    %25 = vector.extract_strided_slice %20 {offsets = [4, 0], sizes = [43, 120], strides = [1, 1]} : vector<48x120xbf16> to vector<43x120xbf16>
    %26 = tpu.concatenate %21, %22, %23, %24, %25 in 1 : vector<43x120xbf16>, vector<43x120xbf16>, vector<43x120xbf16>, vector<43x120xbf16>, vector<43x120xbf16> -> vector<43x600xbf16>
    %c0_12 = arith.constant 0 : index
    %c0_13 = arith.constant 0 : index
    %27 = vector.load %arg4[%c0_12, %c0_13] : memref<600x160xbf16, #tpu.memory_space<vmem>>, vector<600x160xbf16>
    %cst_14 = arith.constant dense<0.000000e+00> : vector<43x160xf32>
    %28 = tpu.matmul %26, %27, %cst_14 {dimension_numbers = #tpu.dot_dimension_numbers<[1], [0], [0], [1], [0, 0, 1, 1], [], []>} : vector<43x600xbf16>, vector<600x160xbf16>, vector<43x160xf32> -> vector<43x160xf32>
    %29 = vector.extract_strided_slice %20 {offsets = [1, 0], sizes = [43, 120], strides = [1, 1]} : vector<48x120xbf16> to vector<43x120xbf16>
    %30 = vector.extract_strided_slice %20 {offsets = [2, 0], sizes = [43, 120], strides = [1, 1]} : vector<48x120xbf16> to vector<43x120xbf16>
    %31 = vector.extract_strided_slice %20 {offsets = [3, 0], sizes = [43, 120], strides = [1, 1]} : vector<48x120xbf16> to vector<43x120xbf16>
    %32 = vector.extract_strided_slice %20 {offsets = [4, 0], sizes = [43, 120], strides = [1, 1]} : vector<48x120xbf16> to vector<43x120xbf16>
    %33 = vector.extract_strided_slice %20 {offsets = [5, 0], sizes = [43, 120], strides = [1, 1]} : vector<48x120xbf16> to vector<43x120xbf16>
    %34 = tpu.concatenate %29, %30, %31, %32, %33 in 1 : vector<43x120xbf16>, vector<43x120xbf16>, vector<43x120xbf16>, vector<43x120xbf16>, vector<43x120xbf16> -> vector<43x600xbf16>
    %c0_15 = arith.constant 0 : index
    %c0_16 = arith.constant 0 : index
    %35 = vector.load %arg4[%c0_15, %c0_16] : memref<600x160xbf16, #tpu.memory_space<vmem>>, vector<600x160xbf16>
    %cst_17 = arith.constant dense<0.000000e+00> : vector<43x160xf32>
    %36 = tpu.matmul %34, %35, %cst_17 {dimension_numbers = #tpu.dot_dimension_numbers<[1], [0], [0], [1], [0, 0, 1, 1], [], []>} : vector<43x600xbf16>, vector<600x160xbf16>, vector<43x160xf32> -> vector<43x160xf32>
    %37 = vector.extract_strided_slice %28 {offsets = [0, 0], sizes = [43, 80], strides = [1, 1]} : vector<43x160xf32> to vector<43x80xf32>
    %38 = vector.extract_strided_slice %28 {offsets = [0, 80], sizes = [43, 80], strides = [1, 1]} : vector<43x160xf32> to vector<43x80xf32>
    %39 = arith.maximumf %37, %38 : vector<43x80xf32>
    %40 = vector.extract_strided_slice %36 {offsets = [0, 0], sizes = [43, 80], strides = [1, 1]} : vector<43x160xf32> to vector<43x80xf32>
    %41 = vector.extract_strided_slice %36 {offsets = [0, 80], sizes = [43, 80], strides = [1, 1]} : vector<43x160xf32> to vector<43x80xf32>
    %42 = arith.maximumf %40, %41 : vector<43x80xf32>
    %43 = arith.maximumf %39, %42 : vector<43x80xf32>
    %c0_18 = arith.constant 0 : index
    %c0_19 = arith.constant 0 : index
    %44 = vector.load %arg5[%c0_18, %c0_19] : memref<1x80xf32, #tpu.memory_space<vmem>>, vector<1x80xf32>
    %45 = vector.broadcast %44 : vector<1x80xf32> to vector<43x80xf32>
    %46 = arith.addf %43, %45 : vector<43x80xf32>
    %cst_20 = arith.constant 0.000000e+00 : f32
    %47 = vector.broadcast %cst_20 : f32 to vector<43x80xf32>
    %48 = arith.maximumf %46, %47 : vector<43x80xf32>
    %49 = arith.truncf %48 : vector<43x80xf32> to vector<43x80xbf16>
    %50 = vector.extract_strided_slice %49 {offsets = [0, 0], sizes = [37, 80], strides = [1, 1]} : vector<43x80xbf16> to vector<37x80xbf16>
    %51 = vector.extract_strided_slice %49 {offsets = [2, 0], sizes = [37, 80], strides = [1, 1]} : vector<43x80xbf16> to vector<37x80xbf16>
    %52 = vector.extract_strided_slice %49 {offsets = [4, 0], sizes = [37, 80], strides = [1, 1]} : vector<43x80xbf16> to vector<37x80xbf16>
    %53 = vector.extract_strided_slice %49 {offsets = [6, 0], sizes = [37, 80], strides = [1, 1]} : vector<43x80xbf16> to vector<37x80xbf16>
    %54 = tpu.concatenate %50, %51, %52, %53 in 1 : vector<37x80xbf16>, vector<37x80xbf16>, vector<37x80xbf16>, vector<37x80xbf16> -> vector<37x320xbf16>
    %c0_21 = arith.constant 0 : index
    %c0_22 = arith.constant 0 : index
    %55 = vector.load %arg6[%c0_21, %c0_22] : memref<320x64xbf16, #tpu.memory_space<vmem>>, vector<320x64xbf16>
    %cst_23 = arith.constant dense<0.000000e+00> : vector<37x64xf32>
    %56 = tpu.matmul %54, %55, %cst_23 {dimension_numbers = #tpu.dot_dimension_numbers<[1], [0], [0], [1], [0, 0, 1, 1], [], []>} : vector<37x320xbf16>, vector<320x64xbf16>, vector<37x64xf32> -> vector<37x64xf32>
    %c0_24 = arith.constant 0 : index
    %c0_25 = arith.constant 0 : index
    %57 = vector.load %arg7[%c0_24, %c0_25] : memref<1x64xf32, #tpu.memory_space<vmem>>, vector<1x64xf32>
    %58 = vector.broadcast %57 : vector<1x64xf32> to vector<37x64xf32>
    %59 = arith.addf %56, %58 : vector<37x64xf32>
    %cst_26 = arith.constant 0.000000e+00 : f32
    %60 = vector.broadcast %cst_26 : f32 to vector<37x64xf32>
    %61 = arith.maximumf %59, %60 : vector<37x64xf32>
    %62 = arith.truncf %61 : vector<37x64xf32> to vector<37x64xbf16>
    %c0_27 = arith.constant 0 : index
    %c0_28 = arith.constant 0 : index
    %63 = vector.load %arg8[%c0_27, %c0_28] : memref<64x128xbf16, #tpu.memory_space<vmem>>, vector<64x128xbf16>
    %cst_29 = arith.constant dense<0.000000e+00> : vector<37x128xf32>
    %64 = tpu.matmul %62, %63, %cst_29 {dimension_numbers = #tpu.dot_dimension_numbers<[1], [0], [0], [1], [0, 0, 1, 1], [], []>} : vector<37x64xbf16>, vector<64x128xbf16>, vector<37x128xf32> -> vector<37x128xf32>
    %c0_30 = arith.constant 0 : index
    %c0_31 = arith.constant 0 : index
    %65 = vector.load %arg9[%c0_30, %c0_31] : memref<1x128xf32, #tpu.memory_space<vmem>>, vector<1x128xf32>
    %66 = vector.broadcast %65 : vector<1x128xf32> to vector<37x128xf32>
    %67 = arith.addf %64, %66 : vector<37x128xf32>
    %cst_32 = arith.constant 0.000000e+00 : f32
    %68 = vector.broadcast %cst_32 : f32 to vector<37x128xf32>
    %69 = arith.maximumf %67, %68 : vector<37x128xf32>
    %cst_33 = arith.constant 0.000000e+00 : f32
    %70 = vector.broadcast %cst_33 : f32 to vector<11x128xf32>
    %71 = tpu.concatenate %69, %70 in 0 : vector<37x128xf32>, vector<11x128xf32> -> vector<48x128xf32>
    %c0_34 = arith.constant 0 : index
    %c0_35 = arith.constant 0 : index
    %72 = vector.load %arg10[%c0_34, %c0_35] : memref<48x128xf32, #tpu.memory_space<vmem>>, vector<48x128xf32>
    tpu.vector_store %arg10[%c0_34, %c0_35], %71 {strides = array<i32>} : memref<48x128xf32, #tpu.memory_space<vmem>>, vector<48x128xf32>,
    return
  }
  func.func @transform_0(%arg0: i32) -> (i32, i32, i32) {
    %c0_i32 = arith.constant 0 : i32
    %c0_i32_0 = arith.constant 0 : i32
    %c0_i32_1 = arith.constant 0 : i32
    return %c0_i32, %arg0, %c0_i32_0 : i32, i32, i32
  }
  func.func @transform_1(%arg0: i32) -> (i32, i32) {
    %c0_i32 = arith.constant 0 : i32
    %c0_i32_0 = arith.constant 0 : i32
    %c0_i32_1 = arith.constant 0 : i32
    return %c0_i32, %c0_i32_0 : i32, i32
  }
  func.func @transform_2(%arg0: i32) -> (i32, i32) {
    %c0_i32 = arith.constant 0 : i32
    %c0_i32_0 = arith.constant 0 : i32
    %c0_i32_1 = arith.constant 0 : i32
    return %c0_i32, %c0_i32_0 : i32, i32
  }
  func.func @transform_3(%arg0: i32) -> (i32, i32) {
    %c0_i32 = arith.constant 0 : i32
    %c0_i32_0 = arith.constant 0 : i32
    %c0_i32_1 = arith.constant 0 : i32
    return %c0_i32, %c0_i32_0 : i32, i32
  }
  func.func @transform_4(%arg0: i32) -> (i32, i32) {
    %c0_i32 = arith.constant 0 : i32
    %c0_i32_0 = arith.constant 0 : i32
    %c0_i32_1 = arith.constant 0 : i32
    return %c0_i32, %c0_i32_0 : i32, i32
  }
  func.func @transform_5(%arg0: i32) -> (i32, i32) {
    %c0_i32 = arith.constant 0 : i32
    %c0_i32_0 = arith.constant 0 : i32
    %c0_i32_1 = arith.constant 0 : i32
    return %c0_i32, %c0_i32_0 : i32, i32
  }
  func.func @transform_6(%arg0: i32) -> (i32, i32) {
    %c0_i32 = arith.constant 0 : i32
    %c0_i32_0 = arith.constant 0 : i32
    %c0_i32_1 = arith.constant 0 : i32
    return %c0_i32, %c0_i32_0 : i32, i32
  }
  func.func @transform_7(%arg0: i32) -> (i32, i32) {
    %c0_i32 = arith.constant 0 : i32
    %c0_i32_0 = arith.constant 0 : i32
    %c0_i32_1 = arith.constant 0 : i32
    return %c0_i32, %c0_i32_0 : i32, i32
  }
  func.func @transform_8(%arg0: i32) -> (i32, i32) {
    %c0_i32 = arith.constant 0 : i32
    %c0_i32_0 = arith.constant 0 : i32
    %c0_i32_1 = arith.constant 0 : i32
    return %c0_i32, %c0_i32_0 : i32, i32
  }
  func.func @transform_9(%arg0: i32) -> (i32, i32) {
    %c0_i32 = arith.constant 0 : i32
    %c0_i32_0 = arith.constant 0 : i32
    return %arg0, %c0_i32 : i32, i32
  }
}

</mosaic_0001>

<llo_original>
// kernel: cnn_forward.1
$region0: #{cnn_forward.1}
  #allocation0 [shape = 'u32[]', space=smem, size = 0x4, offset = 0x4, fixed_abs, tag = 'smem constant byte address 0x4 - core index']
  #allocation1 [shape = 'u32[144,128]{1,0:T(1,128)}', space=vmem, size = 0x12000, scoped, tag = 'internal scratch']
  %s0 = inlined_call_operand.vmem [shape: bf16[2,96,140], index: 0, kind: input, shape index: {}]
  %s1 = inlined_call_operand.vmem [shape: bf16[140,240], index: 1, kind: input, shape index: {}]
  %s2 = inlined_call_operand.vmem [shape: f32[1,120], index: 2, kind: input, shape index: {}]
  %s3 = inlined_call_operand.vmem [shape: bf16[600,160], index: 3, kind: input, shape index: {}]
  %s4 = inlined_call_operand.vmem [shape: f32[1,80], index: 4, kind: input, shape index: {}]
  %s5 = inlined_call_operand.vmem [shape: bf16[320,64], index: 5, kind: input, shape index: {}]
  %s6 = inlined_call_operand.vmem [shape: f32[1,64], index: 6, kind: input, shape index: {}]
  %s7 = inlined_call_operand.vmem [shape: bf16[64,128], index: 7, kind: input, shape index: {}]
  %s8 = inlined_call_operand.vmem [shape: f32[1,128], index: 8, kind: input, shape index: {}]
  %s9 = inlined_call_operand.vmem [shape: f32[96,128], index: 9, kind: output, shape index: {}]
  %s10 = sld [smem:[#allocation0]]
  $region107: #{cnn_forward.1} parent=0
    _
  %s12 = ssub.s32 1, %s10
  %s13 = scalar_select 0, %s12, %s10
  $region1: #{cnn_forward.1} parent=0
    #allocation2 [shape = 'u8[98304]{0}', space=vmem, size = 0x18000, scoped, tag = 'input window, operand 0']
    loop: start=0, step=1, limit=4
    $region2: #{cnn_forward.1} parent=1 // loop_pre_header
      _
    $region3: #{cnn_forward.1} parent=1 // loop_header
      %s15 = sphi 0, %s19
      %p16 = scmp.ge.s32.totalorder %s15, 4
      %s25 = sphi 0, %s27
      %s28 = sphi 0, %s25
      %s29 = sphi 0, %s28
      %s45 = sphi 0, %s29
      %s49 = sphi 0, %s49
      %s51 = sphi 0, %s49
      %s52 = sphi 0, %s51
      %s66 = sphi 0, %s52
      %s70 = sphi 0, %s70
      %s72 = sphi 0, %s70
      %s73 = sphi 0, %s72
      %s87 = sphi 0, %s73
      %s91 = sphi 0, %s91
      %s93 = sphi 0, %s91
      %s94 = sphi 0, %s93
      %s108 = sphi 0, %s94
      %s112 = sphi 0, %s112
      %s114 = sphi 0, %s112
      %s115 = sphi 0, %s114
      %s129 = sphi 0, %s115
      %s133 = sphi 0, %s133
      %s135 = sphi 0, %s133
      %s136 = sphi 0, %s135
      %s150 = sphi 0, %s136
      %s154 = sphi 0, %s154
      %s156 = sphi 0, %s154
      %s157 = sphi 0, %s156
      %s171 = sphi 0, %s157
      %s175 = sphi 0, %s175
      %s177 = sphi 0, %s175
      %s178 = sphi 0, %s177
      %s192 = sphi 0, %s178
      %s196 = sphi 0, %s196
      %s198 = sphi 0, %s196
      %s199 = sphi 0, %s198
      %s213 = sphi 0, %s199
      %s219 = sphi 0, %s221
      %s222 = sphi 0, %s219
      %s223 = sphi 0, %s222
      %s239 = sphi 0, %s223
    $region4: #{cnn_forward.1} parent=1 // loop_header_branch
      %18 = sbr.rel (%p16) target = $region8
    $region5: #{cnn_forward.1} parent=1 // loop_body
      %s20 = ssub.s32 %s15, 1
      %s21 = ssub.s32 %s15, 2
      %s22 = sadd.s32 %s15, 1
      %s23 = ssub.s32 %s15, %s22
      %p24 = scmp.eq.s32.totalorder %s23, 0
      %s26 = sadd.s32 %s25, 1
      %s27 = scalar_select %p24, %s25, %s26
      %p30 = pneg %p24
      %p31 = scmp.eq.s32.totalorder %s15, 1
      %p32 = por %p30, %p31
      %p33 = scmp.ne.s32.totalorder %s25, %s28
      %p34 = scmp.eq.s32.totalorder %s15, 0
      %p35 = por %p33, %p34
      %p36 = scmp.ne.s32.totalorder %s25, %s28
      %p37 = scmp.eq.s32.totalorder %s20, 1
      %p38 = por %p36, %p37
      %p39 = scmp.ne.s32.totalorder %s28, %s29
      %p40 = scmp.eq.s32.totalorder %s20, 0
      %p41 = por %p39, %p40
      %p42 = scmp.ne.s32.totalorder %s28, %s29
      %p43 = scmp.eq.s32.totalorder %s21, 1
      %p44 = por %p42, %p43
      %p46 = scmp.ne.s32.totalorder %s29, %s45
      %p47 = scmp.eq.s32.totalorder %s21, 0
      %p48 = por %p46, %p47
      %s50 = sadd.s32 %s49, 1
      %p53 = scmp.eq.s32.totalorder %s15, 1
      %p54 = scmp.ne.s32.totalorder %s49, %s51
      %p55 = scmp.eq.s32.totalorder %s15, 0
      %p56 = por %p54, %p55
      %p57 = scmp.ne.s32.totalorder %s49, %s51
      %p58 = scmp.eq.s32.totalorder %s20, 1
      %p59 = por %p57, %p58
      %p60 = scmp.ne.s32.totalorder %s51, %s52
      %p61 = scmp.eq.s32.totalorder %s20, 0
      %p62 = por %p60, %p61
      %p63 = scmp.ne.s32.totalorder %s51, %s52
      %p64 = scmp.eq.s32.totalorder %s21, 1
      %p65 = por %p63, %p64
      %p67 = scmp.ne.s32.totalorder %s52, %s66
      %p68 = scmp.eq.s32.totalorder %s21, 0
      %p69 = por %p67, %p68
      %s71 = sadd.s32 %s70, 1
      %p74 = scmp.eq.s32.totalorder %s15, 1
      %p75 = scmp.ne.s32.totalorder %s70, %s72
      %p76 = scmp.eq.s32.totalorder %s15, 0
      %p77 = por %p75, %p76
      %p78 = scmp.ne.s32.totalorder %s70, %s72
      %p79 = scmp.eq.s32.totalorder %s20, 1
      %p80 = por %p78, %p79
      %p81 = scmp.ne.s32.totalorder %s72, %s73
      %p82 = scmp.eq.s32.totalorder %s20, 0
      %p83 = por %p81, %p82
      %p84 = scmp.ne.s32.totalorder %s72, %s73
      %p85 = scmp.eq.s32.totalorder %s21, 1
      %p86 = por %p84, %p85
      %p88 = scmp.ne.s32.totalorder %s73, %s87
      %p89 = scmp.eq.s32.totalorder %s21, 0
      %p90 = por %p88, %p89
      %s92 = sadd.s32 %s91, 1
      %p95 = scmp.eq.s32.totalorder %s15, 1
      %p96 = scmp.ne.s32.totalorder %s91, %s93
      %p97 = scmp.eq.s32.totalorder %s15, 0
      %p98 = por %p96, %p97
      %p99 = scmp.ne.s32.totalorder %s91, %s93
      %p100 = scmp.eq.s32.totalorder %s20, 1
      %p101 = por %p99, %p100
      %p102 = scmp.ne.s32.totalorder %s93, %s94
      %p103 = scmp.eq.s32.totalorder %s20, 0
      %p104 = por %p102, %p103
      %p105 = scmp.ne.s32.totalorder %s93, %s94
      %p106 = scmp.eq.s32.totalorder %s21, 1
      %p107 = por %p105, %p106
      %p109 = scmp.ne.s32.totalorder %s94, %s108
      %p110 = scmp.eq.s32.totalorder %s21, 0
      %p111 = por %p109, %p110
      %s113 = sadd.s32 %s112, 1
      %p116 = scmp.eq.s32.totalorder %s15, 1
      %p117 = scmp.ne.s32.totalorder %s112, %s114
      %p118 = scmp.eq.s32.totalorder %s15, 0
      %p119 = por %p117, %p118
      %p120 = scmp.ne.s32.totalorder %s112, %s114
      %p121 = scmp.eq.s32.totalorder %s20, 1
      %p122 = por %p120, %p121
      %p123 = scmp.ne.s32.totalorder %s114, %s115
      %p124 = scmp.eq.s32.totalorder %s20, 0
      %p125 = por %p123, %p124
      %p126 = scmp.ne.s32.totalorder %s114, %s115
      %p127 = scmp.eq.s32.totalorder %s21, 1
      %p128 = por %p126, %p127
      %p130 = scmp.ne.s32.totalorder %s115, %s129
      %p131 = scmp.eq.s32.totalorder %s21, 0
      %p132 = por %p130, %p131
      %s134 = sadd.s32 %s133, 1
      %p137 = scmp.eq.s32.totalorder %s15, 1
      %p138 = scmp.ne.s32.totalorder %s133, %s135
      %p139 = scmp.eq.s32.totalorder %s15, 0
      %p140 = por %p138, %p139
      %p141 = scmp.ne.s32.totalorder %s133, %s135
      %p142 = scmp.eq.s32.totalorder %s20, 1
      %p143 = por %p141, %p142
      %p144 = scmp.ne.s32.totalorder %s135, %s136
      %p145 = scmp.eq.s32.totalorder %s20, 0
      %p146 = por %p144, %p145
      %p147 = scmp.ne.s32.totalorder %s135, %s136
      %p148 = scmp.eq.s32.totalorder %s21, 1
      %p149 = por %p147, %p148
      %p151 = scmp.ne.s32.totalorder %s136, %s150
      %p152 = scmp.eq.s32.totalorder %s21, 0
      %p153 = por %p151, %p152
      %s155 = sadd.s32 %s154, 1
      %p158 = scmp.eq.s32.totalorder %s15, 1
      %p159 = scmp.ne.s32.totalorder %s154, %s156
      %p160 = scmp.eq.s32.totalorder %s15, 0
      %p161 = por %p159, %p160
      %p162 = scmp.ne.s32.totalorder %s154, %s156
      %p163 = scmp.eq.s32.totalorder %s20, 1
      %p164 = por %p162, %p163
      %p165 = scmp.ne.s32.totalorder %s156, %s157
      %p166 = scmp.eq.s32.totalorder %s20, 0
      %p167 = por %p165, %p166
      %p168 = scmp.ne.s32.totalorder %s156, %s157
      %p169 = scmp.eq.s32.totalorder %s21, 1
      %p170 = por %p168, %p169
      %p172 = scmp.ne.s32.totalorder %s157, %s171
      %p173 = scmp.eq.s32.totalorder %s21, 0
      %p174 = por %p172, %p173
      %s176 = sadd.s32 %s175, 1
      %p179 = scmp.eq.s32.totalorder %s15, 1
      %p180 = scmp.ne.s32.totalorder %s175, %s177
      %p181 = scmp.eq.s32.totalorder %s15, 0
      %p182 = por %p180, %p181
      %p183 = scmp.ne.s32.totalorder %s175, %s177
      %p184 = scmp.eq.s32.totalorder %s20, 1
      %p185 = por %p183, %p184
      %p186 = scmp.ne.s32.totalorder %s177, %s178
      %p187 = scmp.eq.s32.totalorder %s20, 0
      %p188 = por %p186, %p187
      %p189 = scmp.ne.s32.totalorder %s177, %s178
      %p190 = scmp.eq.s32.totalorder %s21, 1
      %p191 = por %p189, %p190
      %p193 = scmp.ne.s32.totalorder %s178, %s192
      %p194 = scmp.eq.s32.totalorder %s21, 0
      %p195 = por %p193, %p194
      %s197 = sadd.s32 %s196, 1
      %p200 = scmp.eq.s32.totalorder %s15, 1
      %p201 = scmp.ne.s32.totalorder %s196, %s198
      %p202 = scmp.eq.s32.totalorder %s15, 0
      %p203 = por %p201, %p202
      %p204 = scmp.ne.s32.totalorder %s196, %s198
      %p205 = scmp.eq.s32.totalorder %s20, 1
      %p206 = por %p204, %p205
      %p207 = scmp.ne.s32.totalorder %s198, %s199
      %p208 = scmp.eq.s32.totalorder %s20, 0
      %p209 = por %p207, %p208
      %p210 = scmp.ne.s32.totalorder %s198, %s199
      %p211 = scmp.eq.s32.totalorder %s21, 1
      %p212 = por %p210, %p211
      %p214 = scmp.ne.s32.totalorder %s199, %s213
      %p215 = scmp.eq.s32.totalorder %s21, 0
      %p216 = por %p214, %p215
      %s217 = ssub.s32 %s15, %s22
      %p218 = scmp.eq.s32.totalorder %s217, 0
      %s220 = sadd.s32 %s219, 1
      %s221 = scalar_select %p218, %s219, %s220
      %p224 = pneg %p218
      %p225 = scmp.eq.s32.totalorder %s15, 1
      %p226 = por %p224, %p225
      %p227 = scmp.ne.s32.totalorder %s219, %s222
      %p228 = scmp.eq.s32.totalorder %s15, 0
      %p229 = por %p227, %p228
      %p230 = scmp.ne.s32.totalorder %s219, %s222
      %p231 = scmp.eq.s32.totalorder %s20, 1
      %p232 = por %p230, %p231
      %p233 = scmp.ne.s32.totalorder %s222, %s223
      %p234 = scmp.eq.s32.totalorder %s20, 0
      %p235 = por %p233, %p234
      %p236 = scmp.ne.s32.totalorder %s222, %s223
      %p237 = scmp.eq.s32.totalorder %s21, 1
      %p238 = por %p236, %p237
      %p240 = scmp.ne.s32.totalorder %s223, %s239
      %p241 = scmp.eq.s32.totalorder %s21, 0
      %p242 = por %p240, %p241
      %p243 = scmp.le.s32.totalorder 1, %s15
      %p244 = scmp.lt.s32.totalorder %s15, 3
      %p245 = pnand %p243, %p244
      %p246 = pneg %p245
      // Predicated region
      $region9: #{cnn_forward.1} parent=5 // pred_check
        _
      $region10: #{cnn_forward.1} parent=5 // pred_check_branch
        %248 = sbr.rel (%p245) target = $region12
      $region11: #{cnn_forward.1} parent=5 // pred_region
        %s249 = ssub.s32 %s15, 1
        // Predicated region
        $region13: #{cnn_forward.1} parent=11 // pred_check
          %p250 = pneg %p62
        $region14: #{cnn_forward.1} parent=11 // pred_check_branch
          %252 = sbr.rel (%p250) target = $region16
        $region15: #{cnn_forward.1} parent=11 // pred_region
          _
        $region16: #{cnn_forward.1} parent=11 // pred_fallthru
          _
        // Predicated region
        $region17: #{cnn_forward.1} parent=11 // pred_check
          %p253 = pneg %p83
        $region18: #{cnn_forward.1} parent=11 // pred_check_branch
          %255 = sbr.rel (%p253) target = $region20
        $region19: #{cnn_forward.1} parent=11 // pred_region
          _
        $region20: #{cnn_forward.1} parent=11 // pred_fallthru
          _
        // Predicated region
        $region21: #{cnn_forward.1} parent=11 // pred_check
          %p256 = pneg %p104
        $region22: #{cnn_forward.1} parent=11 // pred_check_branch
          %258 = sbr.rel (%p256) target = $region24
        $region23: #{cnn_forward.1} parent=11 // pred_region
          _
        $region24: #{cnn_forward.1} parent=11 // pred_fallthru
          _
        // Predicated region
        $region25: #{cnn_forward.1} parent=11 // pred_check
          %p259 = pneg %p125
        $region26: #{cnn_forward.1} parent=11 // pred_check_branch
          %261 = sbr.rel (%p259) target = $region28
        $region27: #{cnn_forward.1} parent=11 // pred_region
          _
        $region28: #{cnn_forward.1} parent=11 // pred_fallthru
          _
        // Predicated region
        $region29: #{cnn_forward.1} parent=11 // pred_check
          %p262 = pneg %p146
        $region30: #{cnn_forward.1} parent=11 // pred_check_branch
          %264 = sbr.rel (%p262) target = $region32
        $region31: #{cnn_forward.1} parent=11 // pred_region
          _
        $region32: #{cnn_forward.1} parent=11 // pred_fallthru
          _
        // Predicated region
        $region33: #{cnn_forward.1} parent=11 // pred_check
          %p265 = pneg %p167
        $region34: #{cnn_forward.1} parent=11 // pred_check_branch
          %267 = sbr.rel (%p265) target = $region36
        $region35: #{cnn_forward.1} parent=11 // pred_region
          _
        $region36: #{cnn_forward.1} parent=11 // pred_fallthru
          _
        // Predicated region
        $region37: #{cnn_forward.1} parent=11 // pred_check
          %p268 = pneg %p188
        $region38: #{cnn_forward.1} parent=11 // pred_check_branch
          %270 = sbr.rel (%p268) target = $region40
        $region39: #{cnn_forward.1} parent=11 // pred_region
          _
        $region40: #{cnn_forward.1} parent=11 // pred_fallthru
          _
        // Predicated region
        $region41: #{cnn_forward.1} parent=11 // pred_check
          %p271 = pneg %p209
        $region42: #{cnn_forward.1} parent=11 // pred_check_branch
          %273 = sbr.rel (%p271) target = $region44
        $region43: #{cnn_forward.1} parent=11 // pred_region
          _
        $region44: #{cnn_forward.1} parent=11 // pred_fallthru
          _
      $region12: #{cnn_forward.1} parent=5 // pred_fallthru
        _
      %p274 = scmp.lt.s32.totalorder %s15, 2
      // Predicated region
      $region45: #{cnn_forward.1} parent=5 // pred_check
        %p275 = pneg %p274
      $region46: #{cnn_forward.1} parent=5 // pred_check_branch
        %277 = sbr.rel (%p275) target = $region48
      $region47: #{cnn_forward.1} parent=5 // pred_region
        // Predicated region
        $region49: #{cnn_forward.1} parent=47 // pred_check
          %p278 = pneg %p35
        $region50: #{cnn_forward.1} parent=47 // pred_check_branch
          %280 = sbr.rel (%p278) target = $region52
        $region51: #{cnn_forward.1} parent=47 // pred_region
          %s281 = sand.u32 %s25, 1
          %s282 = sand.u32 %s25, 1
          %s283 = smul.addr %s282, 96
          %s284 = scalar_lea.vmem [#allocation2], %s283
          %s285 = smul.u32 6, %s15
          %s286 = smul.addr %s285, 2
          %s287 = smul.addr %s286, 4
          %s288 = scalar_lea.vmem %s0, %s287
          // Predicated region
          $region53: #{cnn_forward.1} parent=51 // pred_check
            _
          $region54: #{cnn_forward.1} parent=51 // pred_check_branch
            %290 = sbr.rel (0) target = $region56
          $region55: #{cnn_forward.1} parent=51 // pred_region
            // Predicated region
            $region57: #{cnn_forward.1} parent=55 // pred_check
              _
            $region58: #{cnn_forward.1} parent=55 // pred_check_branch
              %292 = sbr.rel (0) target = $region60
            $region59: #{cnn_forward.1} parent=55 // pred_region
              // Predicated region
              $region72: #{cnn_forward.1} parent=59 // pred_check
                _
              $region73: #{cnn_forward.1} parent=59 // pred_check_branch
                %330 = sbr.rel (0) target = $region75
              $region74: #{cnn_forward.1} parent=59 // pred_region
                loop: start=0, step=1, limit=1
                $region76: #{cnn_forward.1} parent=74 // loop_pre_header
                  _
                $region77: #{cnn_forward.1} parent=74 // loop_header
                  %s332 = sphi 0, %s336
                  %p333 = scmp.ge.s32.totalorder %s332, 1
                  %s337 = sphi %s288, %s288
                  %s338 = sphi %s284, %s284
                $region78: #{cnn_forward.1} parent=74 // loop_header_branch
                  %335 = sbr.rel (%p333) target = $region82
                $region79: #{cnn_forward.1} parent=74 // loop_body
                  %v339 = vld [vmem:[%s337] sm:$0xff]
                  %340 = vst [vmem:[%s338] sm:$0xff] %v339
                  %v341 = vld [vmem:[%s337 + $0x8] sm:$0xff]
                  %342 = vst [vmem:[%s338 + $0x8] sm:$0xff] %v341
                  %v343 = vld [vmem:[%s337 + $0x10] sm:$0xff]
                  %344 = vst [vmem:[%s338 + $0x10] sm:$0xff] %v343
                  %v345 = vld [vmem:[%s337 + $0x18] sm:$0xff]
                  %346 = vst [vmem:[%s338 + $0x18] sm:$0xff] %v345
                  %v347 = vld [vmem:[%s337 + $0x20] sm:$0xff]
                  %348 = vst [vmem:[%s338 + $0x20] sm:$0xff] %v347
                  %v349 = vld [vmem:[%s337 + $0x28] sm:$0xff]
                  %350 = vst [vmem:[%s338 + $0x28] sm:$0xff] %v349
                  %v351 = vld [vmem:[%s337 + $0x60] sm:$0xff]
                  %352 = vst [vmem:[%s338 + $0x30] sm:$0xff] %v351
                  %v353 = vld [vmem:[%s337 + $0x68] sm:$0xff]
                  %354 = vst [vmem:[%s338 + $0x38] sm:$0xff] %v353
                  %v355 = vld [vmem:[%s337 + $0x70] sm:$0xff]
                  %356 = vst [vmem:[%s338 + $0x40] sm:$0xff] %v355
                  %v357 = vld [vmem:[%s337 + $0x78] sm:$0xff]
                  %358 = vst [vmem:[%s338 + $0x48] sm:$0xff] %v357
                  %v359 = vld [vmem:[%s337 + $0x80] sm:$0xff]
                  %360 = vst [vmem:[%s338 + $0x50] sm:$0xff] %v359
                  %v361 = vld [vmem:[%s337 + $0x88] sm:$0xff]
                  %362 = vst [vmem:[%s338 + $0x58] sm:$0xff] %v361
                $region80: #{cnn_forward.1} parent=74 // loop_footer
                  %s336 = sadd.s32 1, %s332
                $region81: #{cnn_forward.1} parent=74 // loop_footer_branch
                  %331 = sbr.rel target = $region77
                $region82: #{cnn_forward.1} parent=74 // loop_exit
                  _
              $region75: #{cnn_forward.1} parent=59 // pred_fallthru
                _
              // Predicated region
              $region83: #{cnn_forward.1} parent=59 // pred_check
                _
              $region84: #{cnn_forward.1} parent=59 // pred_check_branch
                %364 = sbr.rel target = $region86
              $region85: #{cnn_forward.1} parent=59 // pred_region
                _
              $region86: #{cnn_forward.1} parent=59 // pred_fallthru
                _
            $region60: #{cnn_forward.1} parent=55 // pred_fallthru
              _
            // Predicated region
            $region61: #{cnn_forward.1} parent=55 // pred_check
              _
            $region62: #{cnn_forward.1} parent=55 // pred_check_branch
              %294 = sbr.rel target = $region64
            $region63: #{cnn_forward.1} parent=55 // pred_region
              %s296 = ssub.s32 256, 1
              loop: start=0, step=1, limit=1
              $region65: #{cnn_forward.1} parent=63 // loop_pre_header
                _
              $region66: #{cnn_forward.1} parent=63 // loop_header
                %s298 = sphi 0, %s302
                %p299 = scmp.ge.s32.totalorder %s298, 1
                %s303 = sphi %s288, %s288
                %s304 = sphi %s284, %s284
              $region67: #{cnn_forward.1} parent=63 // loop_header_branch
                %301 = sbr.rel (%p299) target = $region71
              $region68: #{cnn_forward.1} parent=63 // loop_body
                %v305 = vld [vmem:[%s303] sm:%s296]
                %306 = vst [vmem:[%s304] sm:%s296] %v305
                %v307 = vld [vmem:[%s303 + $0x8] sm:%s296]
                %308 = vst [vmem:[%s304 + $0x8] sm:%s296] %v307
                %v309 = vld [vmem:[%s303 + $0x10] sm:%s296]
                %310 = vst [vmem:[%s304 + $0x10] sm:%s296] %v309
                %v311 = vld [vmem:[%s303 + $0x18] sm:%s296]
                %312 = vst [vmem:[%s304 + $0x18] sm:%s296] %v311
                %v313 = vld [vmem:[%s303 + $0x20] sm:%s296]
                %314 = vst [vmem:[%s304 + $0x20] sm:%s296] %v313
                %v315 = vld [vmem:[%s303 + $0x28] sm:%s296]
                %316 = vst [vmem:[%s304 + $0x28] sm:%s296] %v315
                %v317 = vld [vmem:[%s303 + $0x60] sm:%s296]
                %318 = vst [vmem:[%s304 + $0x30] sm:%s296] %v317
                %v319 = vld [vmem:[%s303 + $0x68] sm:%s296]
                %320 = vst [vmem:[%s304 + $0x38] sm:%s296] %v319
                %v321 = vld [vmem:[%s303 + $0x70] sm:%s296]
                %322 = vst [vmem:[%s304 + $0x40] sm:%s296] %v321
                %v323 = vld [vmem:[%s303 + $0x78] sm:%s296]
                %324 = vst [vmem:[%s304 + $0x48] sm:%s296] %v323
                %v325 = vld [vmem:[%s303 + $0x80] sm:%s296]
                %326 = vst [vmem:[%s304 + $0x50] sm:%s296] %v325
                %v327 = vld [vmem:[%s303 + $0x88] sm:%s296]
                %328 = vst [vmem:[%s304 + $0x58] sm:%s296] %v327
              $region69: #{cnn_forward.1} parent=63 // loop_footer
                %s302 = sadd.s32 1, %s298
              $region70: #{cnn_forward.1} parent=63 // loop_footer_branch
                %297 = sbr.rel target = $region66
              $region71: #{cnn_forward.1} parent=63 // loop_exit
                _
            $region64: #{cnn_forward.1} parent=55 // pred_fallthru
              _
          $region56: #{cnn_forward.1} parent=51 // pred_fallthru
            _
          %365 = vnop
        $region52: #{cnn_forward.1} parent=47 // pred_fallthru
          _
      $region48: #{cnn_forward.1} parent=5 // pred_fallthru
        _
      %p366 = scmp.le.s32.totalorder 1, %s15
      %p367 = scmp.lt.s32.totalorder %s15, 3
      %p368 = pnand %p366, %p367
      %p369 = pneg %p368
      // Predicated region
      $region87: #{cnn_forward.1} parent=5 // pred_check
        _
      $region88: #{cnn_forward.1} parent=5 // pred_check_branch
        %371 = sbr.rel (%p368) target = $region90
      $region89: #{cnn_forward.1} parent=5 // pred_region
        %s372 = ssub.s32 %s15, 1
        %s373 = sand.u32 %s28, 1
        %s374 = sand.u32 %s28, 1
        %s375 = smul.addr %s374, 96
        %s376 = scalar_lea.vmem [#allocation2], %s375
        // Predicated region
        $region91: #{cnn_forward.1} parent=89 // pred_check
          %p377 = pneg %p41
        $region92: #{cnn_forward.1} parent=89 // pred_check_branch
          %379 = sbr.rel (%p377) target = $region94
        $region93: #{cnn_forward.1} parent=89 // pred_region
          _
        $region94: #{cnn_forward.1} parent=89 // pred_fallthru
          _
        %s380 = sand.u32 %s28, 1
        %s381 = sand.u32 %s28, 1
        %s382 = smul.addr %s381, 96
        %s383 = scalar_lea.vmem [#allocation2], %s382
        %p384 = pneg %p41
        %p385 = pneg %p38
        %p386 = pneg %p62
        %p387 = pneg %p59
        %p388 = pneg %p83
        %p389 = pneg %p80
        %p390 = pneg %p104
        %p391 = pneg %p101
        %p392 = pneg %p125
        %p393 = pneg %p122
        %p394 = pneg %p146
        %p395 = pneg %p143
        %p396 = pneg %p167
        %p397 = pneg %p164
        %p398 = pneg %p188
        %p399 = pneg %p185
        %p400 = pneg %p209
        %p401 = pneg %p206
        %p402 = pneg %p235
        %p403 = pneg %p232
        %s404 = smul.u32 6, %s20
        %p405 = scmp.lt.s32.totalorder %s404, 11
        %s406 = scalar_select %p405, %s404, 11
        %s407 = smul.addr %s406, 8
        %s408 = scalar_lea.vmem %s9, %s407
        %s409 = smul.u32 6, %s20
        %s410 = smul.u32 6, %s20
        %p411 = scmp.lt.s32.totalorder %s410, 11
        %s412 = scalar_select %p411, %s410, 11
        %s413 = smul.addr %s412, 8
        %s414 = scalar_lea.vmem %s9, %s413
        %s415 = smul.u32 6, %s20
        %v417 = vld [vmem:[%s376] sm:$0xff]
        %v418 = vld [vmem:[%s376 + $0x8] sm:$0xff]
        %v419 = vld [vmem:[%s376 + $0x10] sm:$0xff]
        %v420 = vld [vmem:[%s376 + $0x18] sm:$0xff]
        %v421 = vld [vmem:[%s376 + $0x20] sm:$0xff]
        %v422 = vld [vmem:[%s376 + $0x28] sm:$0xff]
        %v423 = vld [vmem:[%s1] sm:$0xff]
        %v424 = vld [vmem:[%s1 + $0x8] sm:$0xff]
        %v425 = vld [vmem:[%s1 + $0x10] sm:$0xff]
        %v426 = vld [vmem:[%s1 + $0x18] sm:$0xff]
        %v427 = vld [vmem:[%s1 + $0x20] sm:$0xff]
        %v428 = vld [vmem:[%s1 + $0x28] sm:$0xff]
        %v429 = vld [vmem:[%s1 + $0x30] sm:$0xff]
        %v430 = vld [vmem:[%s1 + $0x38] sm:$0xff]
        %v431 = vld [vmem:[%s1 + $0x40] sm:$0xff]
        %v432 = vld [vmem:[%s1 + $0x48] sm:$0xff]
        %v433 = vld [vmem:[%s1 + $0x50] sm:$0xff]
        %v434 = vld [vmem:[%s1 + $0x58] sm:$0xff]
        %v435 = vld [vmem:[%s1 + $0x60] sm:$0xff]
        %v436 = vld [vmem:[%s1 + $0x68] sm:$0xff]
        %v437 = vld [vmem:[%s1 + $0x70] sm:$0xff]
        %v438 = vld [vmem:[%s1 + $0x78] sm:$0xff]
        %v439 = vld [vmem:[%s1 + $0x80] sm:$0xff]
        %v440 = vld [vmem:[%s1 + $0x88] sm:$0x33]
        %v447 = vunpack.c.l.b16 %v417
        %v448 = vunpack.c.h.b16 %v417
        %v449 = vunpack.c.l.b16 %v418
        %v450 = vunpack.c.h.b16 %v418
        %v451 = vunpack.c.l.b16 %v419
        %v452 = vunpack.c.h.b16 %v419
        %v453 = vunpack.c.l.b16 %v420
        %v454 = vunpack.c.h.b16 %v420
        %v455 = vunpack.c.l.b16 %v421
        %v456 = vunpack.c.h.b16 %v421
        %v457 = vunpack.c.l.b16 %v422
        %v458 = vunpack.c.h.b16 %v422
        %v459 = vpack.c.b16 %v449, %v447
        %v460 = vpack.c.b16 %v450, %v448
        %v461 = vpack.c.b16 %v453, %v451
        %v462 = vpack.c.b16 %v454, %v452
        %v463 = vpack.c.b16 %v457, %v455
        %v464 = vpack.c.b16 %v458, %v456
        %v486 = vunpack.c.l.b16 %v423
        %v487 = vunpack.c.h.b16 %v423
        %v488 = vunpack.c.l.b16 %v424
        %v489 = vunpack.c.h.b16 %v424
        %v490 = vunpack.c.l.b16 %v425
        %v491 = vunpack.c.h.b16 %v425
        %v492 = vunpack.c.l.b16 %v426
        %v493 = vunpack.c.h.b16 %v426
        %v494 = vunpack.c.l.b16 %v427
        %v495 = vunpack.c.h.b16 %v427
        %v496 = vunpack.c.l.b16 %v428
        %v497 = vunpack.c.h.b16 %v428
        %v498 = vunpack.c.l.b16 %v429
        %v499 = vunpack.c.h.b16 %v429
        %v500 = vunpack.c.l.b16 %v430
        %v501 = vunpack.c.h.b16 %v430
        %v502 = vunpack.c.l.b16 %v431
        %v503 = vunpack.c.h.b16 %v431
        %v504 = vunpack.c.l.b16 %v432
        %v505 = vunpack.c.h.b16 %v432
        %v506 = vunpack.c.l.b16 %v433
        %v507 = vunpack.c.h.b16 %v433
        %v508 = vunpack.c.l.b16 %v434
        %v509 = vunpack.c.h.b16 %v434
        %v510 = vunpack.c.l.b16 %v435
        %v511 = vunpack.c.h.b16 %v435
        %v512 = vunpack.c.l.b16 %v436
        %v513 = vunpack.c.h.b16 %v436
        %v514 = vunpack.c.l.b16 %v437
        %v515 = vunpack.c.h.b16 %v437
        %v516 = vunpack.c.l.b16 %v438
        %v517 = vunpack.c.h.b16 %v438
        %v518 = vunpack.c.l.b16 %v439
        %v519 = vunpack.c.h.b16 %v439
        %v520 = vunpack.c.l.b16 %v440
        %v521 = vunpack.c.h.b16 %v440
        %v522 = vpack.c.b16 %v488, %v486
        %v523 = vpack.c.b16 %v489, %v487
        %v524 = vpack.c.b16 %v492, %v490
        %v525 = vpack.c.b16 %v493, %v491
        %v526 = vpack.c.b16 %v496, %v494
        %v527 = vpack.c.b16 %v497, %v495
        %v528 = vpack.c.b16 %v500, %v498
        %v529 = vpack.c.b16 %v501, %v499
        %v530 = vpack.c.b16 %v504, %v502
        %v531 = vpack.c.b16 %v505, %v503
        %v532 = vpack.c.b16 %v508, %v506
        %v533 = vpack.c.b16 %v509, %v507
        %v534 = vpack.c.b16 %v512, %v510
        %v535 = vpack.c.b16 %v513, %v511
        %v536 = vpack.c.b16 %v516, %v514
        %v537 = vpack.c.b16 %v517, %v515
        %v538 = vpack.c.b16 %v520, %v518
        %v539 = vpack.c.b16 %v521, %v519
        %vm556 = vcmask 97280
        %v558 = vsel %vm556, %v460, 0
        %v561 = vsel %vm556, %v462, 0
        %v564 = vsel %vm556, %v464, 0
        %vm566 = vcmask 1045504
        %v568 = vsel %vm566, %v538, 0
        %v571 = vsel %vm566, %v539, 0
        %573 = vmatprep.subr.bf16.mxu0 %v537
        %574 = vmatpush1.bf16.msra.mxu0 %v536
        %575 = vmatprep.subr.bf16.mxu0 %v535
        %576 = vmatpush1.bf16.msra.mxu0 %v534
        %577 = vmatprep.subr.bf16.mxu0 %v533
        %578 = vmatpush1.bf16.msra.mxu0 %v532
        %579 = vmatprep.subr.bf16.mxu0 %v531
        %580 = vmatpush1.bf16.msra.mxu0 %v530
        %581 = vmatprep.subr.bf16.mxu0 %v529
        %582 = vmatpush1.bf16.msra.mxu0 %v528
        %583 = vmatprep.subr.bf16.mxu0 %v527
        %584 = vmatpush1.bf16.msra.mxu0 %v526
        %585 = vmatprep.subr.bf16.mxu0 %v525
        %586 = vmatpush1.bf16.msra.mxu0 %v524
        %587 = vmatprep.subr.bf16.mxu0 %v523
        %588 = vmatpush1.bf16.msra.mxu0 %v522
        %589 = vmatprep.subr.bf16.mxu0 0
        %590 = vmatpush2.bf16.msra.mxu0 0
        %591 = vmatprep.subr.bf16.mxu0 0
        %592 = vmatpush2.bf16.msra.mxu0 0
        %593 = vmatprep.subr.bf16.mxu0 0
        %594 = vmatpush2.bf16.msra.mxu0 0
        %595 = vmatprep.subr.bf16.mxu0 0
        %596 = vmatpush2.bf16.msra.mxu0 0
        %597 = vmatprep.subr.bf16.mxu0 0
        %598 = vmatpush2.bf16.msra.mxu0 0
        %599 = vmatprep.subr.bf16.mxu0 0
        %600 = vmatpush2.bf16.msra.mxu0 0
        %601 = vmatprep.subr.bf16.mxu0 0
        %602 = vmatpush2.bf16.msra.mxu0 0
        %603 = vmatprep.subr.bf16.mxu0 %v571
        %604 = vmatpush2.bf16.msra.mxu0 %v568
        %605 = vmatprep.mubr.bf16.mxu0 %v558
        %606 = vmatmul.mubr.bf16.gmra.mxu0 %v459
        %v607 = vpop.f32.mrf.mxu0
        %v608 = vadd.f32 0.0, %v607
        %v609 = vpop.f32.mrf.mxu0
        %v610 = vadd.f32 0.0, %v609
        %v611 = vpop.f32.mrf.mxu0
        %v612 = vadd.f32 0.0, %v611
        %v613 = vpop.f32.mrf.mxu0
        %v614 = vadd.f32 0.0, %v613
        %615 = vmatprep.mubr.bf16.mxu0 %v561
        %616 = vmatmul.mubr.bf16.gmra.mxu0 %v461
        %v617 = vpop.f32.mrf.mxu0
        %v618 = vadd.f32 0.0, %v617
        %v619 = vpop.f32.mrf.mxu0
        %v620 = vadd.f32 0.0, %v619
        %v621 = vpop.f32.mrf.mxu0
        %v622 = vadd.f32 0.0, %v621
        %v623 = vpop.f32.mrf.mxu0
        %v624 = vadd.f32 0.0, %v623
        %625 = vmatprep.mubr.bf16.mxu0 %v564
        %626 = vmatmul.mubr.bf16.gmra.mxu0 %v463
        %v627 = vpop.f32.mrf.mxu0
        %v628 = vadd.f32 0.0, %v627
        %v629 = vpop.f32.mrf.mxu0
        %v630 = vadd.f32 0.0, %v629
        %v631 = vpop.f32.mrf.mxu0
        %v632 = vadd.f32 0.0, %v631
        %v633 = vpop.f32.mrf.mxu0
        %v634 = vadd.f32 0.0, %v633
        %635 = vdwg.mxu0
        %s636 = scalar_lea.vmem %s376, 48 [#allocation2]
        %v637 = vld [vmem:[%s636] sm:$0xff]
        %v638 = vld [vmem:[%s636 + $0x8] sm:$0xff]
        %v639 = vld [vmem:[%s636 + $0x10] sm:$0xff]
        %v640 = vld [vmem:[%s636 + $0x18] sm:$0xff]
        %v641 = vld [vmem:[%s636 + $0x20] sm:$0xff]
        %v642 = vld [vmem:[%s636 + $0x28] sm:$0xff]
        %v649 = vunpack.c.l.b16 %v637
        %v650 = vunpack.c.h.b16 %v637
        %v651 = vunpack.c.l.b16 %v638
        %v652 = vunpack.c.h.b16 %v638
        %v653 = vunpack.c.l.b16 %v639
        %v654 = vunpack.c.h.b16 %v639
        %v655 = vunpack.c.l.b16 %v640
        %v656 = vunpack.c.h.b16 %v640
        %v657 = vunpack.c.l.b16 %v641
        %v658 = vunpack.c.h.b16 %v641
        %v659 = vunpack.c.l.b16 %v642
        %v660 = vunpack.c.h.b16 %v642
        %v661 = vpack.c.b16 %v651, %v649
        %v662 = vpack.c.b16 %v652, %v650
        %v663 = vpack.c.b16 %v655, %v653
        %v664 = vpack.c.b16 %v656, %v654
        %v665 = vpack.c.b16 %v659, %v657
        %v666 = vpack.c.b16 %v660, %v658
        %v671 = vsel %vm556, %v662, 0
        %v674 = vsel %vm556, %v664, 0
        %v677 = vsel %vm556, %v666, 0
        %679 = vmatprep.subr.bf16.mxu0 %v537
        %680 = vmatpush1.bf16.msra.mxu0 %v536
        %681 = vmatprep.subr.bf16.mxu0 %v535
        %682 = vmatpush1.bf16.msra.mxu0 %v534
        %683 = vmatprep.subr.bf16.mxu0 %v533
        %684 = vmatpush1.bf16.msra.mxu0 %v532
        %685 = vmatprep.subr.bf16.mxu0 %v531
        %686 = vmatpush1.bf16.msra.mxu0 %v530
        %687 = vmatprep.subr.bf16.mxu0 %v529
        %688 = vmatpush1.bf16.msra.mxu0 %v528
        %689 = vmatprep.subr.bf16.mxu0 %v527
        %690 = vmatpush1.bf16.msra.mxu0 %v526
        %691 = vmatprep.subr.bf16.mxu0 %v525
        %692 = vmatpush1.bf16.msra.mxu0 %v524
        %693 = vmatprep.subr.bf16.mxu0 %v523
        %694 = vmatpush1.bf16.msra.mxu0 %v522
        %695 = vmatprep.subr.bf16.mxu0 0
        %696 = vmatpush2.bf16.msra.mxu0 0
        %697 = vmatprep.subr.bf16.mxu0 0
        %698 = vmatpush2.bf16.msra.mxu0 0
        %699 = vmatprep.subr.bf16.mxu0 0
        %700 = vmatpush2.bf16.msra.mxu0 0
        %701 = vmatprep.subr.bf16.mxu0 0
        %702 = vmatpush2.bf16.msra.mxu0 0
        %703 = vmatprep.subr.bf16.mxu0 0
        %704 = vmatpush2.bf16.msra.mxu0 0
        %705 = vmatprep.subr.bf16.mxu0 0
        %706 = vmatpush2.bf16.msra.mxu0 0
        %707 = vmatprep.subr.bf16.mxu0 0
        %708 = vmatpush2.bf16.msra.mxu0 0
        %709 = vmatprep.subr.bf16.mxu0 %v571
        %710 = vmatpush2.bf16.msra.mxu0 %v568
        %711 = vmatprep.mubr.bf16.mxu0 %v671
        %712 = vmatmul.mubr.bf16.gmra.mxu0 %v661
        %v713 = vpop.f32.mrf.mxu0
        %v714 = vadd.f32 0.0, %v713
        %v715 = vpop.f32.mrf.mxu0
        %v716 = vadd.f32 0.0, %v715
        %v717 = vpop.f32.mrf.mxu0
        %v718 = vadd.f32 0.0, %v717
        %v719 = vpop.f32.mrf.mxu0
        %v720 = vadd.f32 0.0, %v719
        %721 = vmatprep.mubr.bf16.mxu0 %v674
        %722 = vmatmul.mubr.bf16.gmra.mxu0 %v663
        %v723 = vpop.f32.mrf.mxu0
        %v724 = vadd.f32 0.0, %v723
        %v725 = vpop.f32.mrf.mxu0
        %v726 = vadd.f32 0.0, %v725
        %v727 = vpop.f32.mrf.mxu0
        %v728 = vadd.f32 0.0, %v727
        %v729 = vpop.f32.mrf.mxu0
        %v730 = vadd.f32 0.0, %v729
        %731 = vmatprep.mubr.bf16.mxu0 %v677
        %732 = vmatmul.mubr.bf16.gmra.mxu0 %v665
        %v733 = vpop.f32.mrf.mxu0
        %v734 = vadd.f32 0.0, %v733
        %v735 = vpop.f32.mrf.mxu0
        %v736 = vadd.f32 0.0, %v735
        %v737 = vpop.f32.mrf.mxu0
        %v738 = vadd.f32 0.0, %v737
        %v739 = vpop.f32.mrf.mxu0
        %v740 = vadd.f32 0.0, %v739
        %741 = vdwg.mxu0
        %754 = vrot.lane.b32.xlu0 %v608, 8
        %v755 = vpop.permute.xlu0 %754
        %756 = vrot.lane.b32.xlu0 %v610, 8
        %v757 = vpop.permute.xlu0 %756
        %758 = vrot.lane.b32.xlu0 %v612, 8
        %v759 = vpop.permute.xlu0 %758
        %760 = vrot.lane.b32.xlu0 %v614, 8
        %v761 = vpop.permute.xlu0 %760
        %762 = vrot.lane.b32.xlu0 %v618, 8
        %v763 = vpop.permute.xlu0 %762
        %764 = vrot.lane.b32.xlu0 %v620, 8
        %v765 = vpop.permute.xlu0 %764
        %766 = vrot.lane.b32.xlu0 %v622, 8
        %v767 = vpop.permute.xlu0 %766
        %768 = vrot.lane.b32.xlu0 %v624, 8
        %v769 = vpop.permute.xlu0 %768
        %770 = vrot.lane.b32.xlu0 %v628, 8
        %v771 = vpop.permute.xlu0 %770
        %772 = vrot.lane.b32.xlu0 %v630, 8
        %v773 = vpop.permute.xlu0 %772
        %774 = vrot.lane.b32.xlu0 %v632, 8
        %v775 = vpop.permute.xlu0 %774
        %776 = vrot.lane.b32.xlu0 %v634, 8
        %v777 = vpop.permute.xlu0 %776
        %vm778 = vcmask 64512
        %v779 = vsel %vm778, %v755, %v757
        %v780 = vsel %vm778, %v759, %v761
        %v781 = vsel %vm778, %v763, %v765
        %v782 = vsel %vm778, %v767, %v769
        %v783 = vsel %vm778, %v771, %v773
        %v784 = vsel %vm778, %v775, %v777
        %v791 = vmax.f32 %v608, %v779
        %v792 = vmax.f32 %v612, %v780
        %v793 = vmax.f32 %v618, %v781
        %v794 = vmax.f32 %v622, %v782
        %v795 = vmax.f32 %v628, %v783
        %v796 = vmax.f32 %v632, %v784
        %809 = vrot.lane.b32.xlu0 %v714, 8
        %v810 = vpop.permute.xlu0 %809
        %811 = vrot.lane.b32.xlu0 %v716, 8
        %v812 = vpop.permute.xlu0 %811
        %813 = vrot.lane.b32.xlu0 %v718, 8
        %v814 = vpop.permute.xlu0 %813
        %815 = vrot.lane.b32.xlu0 %v720, 8
        %v816 = vpop.permute.xlu0 %815
        %817 = vrot.lane.b32.xlu0 %v724, 8
        %v818 = vpop.permute.xlu0 %817
        %819 = vrot.lane.b32.xlu0 %v726, 8
        %v820 = vpop.permute.xlu0 %819
        %821 = vrot.lane.b32.xlu0 %v728, 8
        %v822 = vpop.permute.xlu0 %821
        %823 = vrot.lane.b32.xlu0 %v730, 8
        %v824 = vpop.permute.xlu0 %823
        %825 = vrot.lane.b32.xlu0 %v734, 8
        %v826 = vpop.permute.xlu0 %825
        %827 = vrot.lane.b32.xlu0 %v736, 8
        %v828 = vpop.permute.xlu0 %827
        %829 = vrot.lane.b32.xlu0 %v738, 8
        %v830 = vpop.permute.xlu0 %829
        %831 = vrot.lane.b32.xlu0 %v740, 8
        %v832 = vpop.permute.xlu0 %831
        %v833 = vsel %vm778, %v810, %v812
        %v834 = vsel %vm778, %v814, %v816
        %v835 = vsel %vm778, %v818, %v820
        %v836 = vsel %vm778, %v822, %v824
        %v837 = vsel %vm778, %v826, %v828
        %v838 = vsel %vm778, %v830, %v832
        %v845 = vmax.f32 %v714, %v833
        %v846 = vmax.f32 %v718, %v834
        %v847 = vmax.f32 %v724, %v835
        %v848 = vmax.f32 %v728, %v836
        %v849 = vmax.f32 %v734, %v837
        %v850 = vmax.f32 %v738, %v838
        %v851 = vmax.f32 %v791, %v845
        %v852 = vmax.f32 %v792, %v846
        %v853 = vmax.f32 %v793, %v847
        %v854 = vmax.f32 %v794, %v848
        %v855 = vmax.f32 %v795, %v849
        %v856 = vmax.f32 %v796, %v850
        %v857 = vld [vmem:[%s2] sm:$0x1]
        %v859 = vlaneseq
        %v860 = vshrl.u32 %v859, 7
        %v861 = vsub.s32 0, %v860
        %v862 = vrot.slane %v857, %v861
        %v864 = vadd.f32 %v851, %v862
        %v865 = vadd.f32 %v852, %v862
        %v866 = vadd.f32 %v853, %v862
        %v867 = vadd.f32 %v854, %v862
        %v868 = vadd.f32 %v855, %v862
        %v869 = vadd.f32 %v856, %v862
        %v870 = vmax.f32 %v864, 0.0
        %v871 = vmax.f32 %v865, 0.0
        %v872 = vmax.f32 %v866, 0.0
        %v873 = vmax.f32 %v867, 0.0
        %v874 = vmax.f32 %v868, 0.0
        %v875 = vmax.f32 %v869, 0.0
        %v876 = vpack.c.bf16 %v871, %v870
        %v877 = vpack.c.bf16 %v873, %v872
        %v878 = vpack.c.bf16 %v875, %v874
        %vm879 = vsmask.f32 7424
        %v881 = vshrl.u32 %v876, 16
        %v883 = vshll.u32 %v876, 16
        %v885 = vrot.slane %v883, 1
        %v886 = vor.u32 %v881, %v885
        %v888 = vshll.u32 %v877, 16
        %v890 = vrot.slane %v888, 1
        %v891 = vsel %vm879, %v886, %v890
        %v892 = vshrl.u32 %v877, 16
        %v894 = vor.u32 %v892, %v890
        %v896 = vshll.u32 %v878, 16
        %v898 = vrot.slane %v896, 1
        %v899 = vsel %vm879, %v894, %v898
        %v900 = vshrl.u32 %v878, 16
        %v902 = vor.u32 %v900, %v898
        %903 = vrot.lane.b32.xlu0 %v891, 120
        %v904 = vpop.permute.xlu0 %903
        %905 = vrot.lane.b32.xlu0 %v899, 120
        %v906 = vpop.permute.xlu0 %905
        %907 = vrot.lane.b32.xlu0 %v902, 120
        %v908 = vpop.permute.xlu0 %907
        %vm912 = vcmask 1046528
        %v913 = vrot.slane %v876, 1
        %v914 = vrot.slane %v877, 1
        %v915 = vsel %vm912, %v913, %v914
        %v916 = vrot.slane %v878, 1
        %v917 = vsel %vm912, %v914, %v916
        %918 = vrot.lane.b32.xlu0 %v915, 112
        %v919 = vpop.permute.xlu0 %918
        %920 = vrot.lane.b32.xlu0 %v917, 112
        %v921 = vpop.permute.xlu0 %920
        %922 = vrot.lane.b32.xlu0 %v916, 112
        %v923 = vpop.permute.xlu0 %922
        %vm924 = vsmask.f32 6400
        %v925 = vrot.slane %v881, 1
        %v926 = vrot.slane %v883, 2
        %v927 = vor.u32 %v925, %v926
        %v928 = vrot.slane %v892, 1
        %v929 = vrot.slane %v888, 2
        %v930 = vor.u32 %v928, %v929
        %v931 = vsel %vm924, %v927, %v930
        %v932 = vrot.slane %v900, 1
        %v933 = vrot.slane %v896, 2
        %v934 = vor.u32 %v932, %v933
        %v935 = vsel %vm924, %v930, %v934
        %936 = vrot.lane.b32.xlu0 %v931, 104
        %v937 = vpop.permute.xlu0 %936
        %938 = vrot.lane.b32.xlu0 %v935, 104
        %v939 = vpop.permute.xlu0 %938
        %940 = vrot.lane.b32.xlu0 %v934, 104
        %v941 = vpop.permute.xlu0 %940
        %vm942 = vcmask 1045504
        %v943 = vrot.slane %v876, 2
        %v944 = vrot.slane %v877, 2
        %v945 = vsel %vm942, %v943, %v944
        %v946 = vrot.slane %v878, 2
        %v947 = vsel %vm942, %v944, %v946
        %948 = vrot.lane.b32.xlu0 %v945, 96
        %v949 = vpop.permute.xlu0 %948
        %950 = vrot.lane.b32.xlu0 %v947, 96
        %v951 = vpop.permute.xlu0 %950
        %952 = vrot.lane.b32.xlu0 %v946, 96
        %v953 = vpop.permute.xlu0 %952
        %vm954 = vcmask 982016
        %v956 = vsel %vm954, %v876, %v904
        %v959 = vsel %vm954, %v877, %v906
        %v962 = vsel %vm954, %v878, %v908
        %vm964 = vcmask 916480
        %v966 = vsel %vm964, %v904, %v919
        %v969 = vsel %vm964, %v906, %v921
        %v972 = vsel %vm964, %v908, %v923
        %vm974 = vcmask 850944
        %v976 = vsel %vm974, %v919, %v937
        %v979 = vsel %vm974, %v921, %v939
        %v982 = vsel %vm974, %v923, %v941
        %vm984 = vcmask 785408
        %v986 = vsel %vm984, %v937, %v949
        %v989 = vsel %vm984, %v939, %v951
        %v992 = vsel %vm984, %v941, %v953
        %v994 = vld [vmem:[%s3] sm:$0xff]
        %v995 = vld [vmem:[%s3 + $0x8] sm:$0xff]
        %v996 = vld [vmem:[%s3 + $0x10] sm:$0xff]
        %v997 = vld [vmem:[%s3 + $0x18] sm:$0xff]
        %v998 = vld [vmem:[%s3 + $0x20] sm:$0xff]
        %v999 = vld [vmem:[%s3 + $0x28] sm:$0xff]
        %v1000 = vld [vmem:[%s3 + $0x30] sm:$0xff]
        %v1001 = vld [vmem:[%s3 + $0x38] sm:$0xff]
        %v1002 = vld [vmem:[%s3 + $0x40] sm:$0xff]
        %v1003 = vld [vmem:[%s3 + $0x48] sm:$0xff]
        %v1004 = vld [vmem:[%s3 + $0x50] sm:$0xff]
        %v1005 = vld [vmem:[%s3 + $0x58] sm:$0xff]
        %v1006 = vld [vmem:[%s3 + $0x60] sm:$0xff]
        %v1007 = vld [vmem:[%s3 + $0x68] sm:$0xff]
        %v1008 = vld [vmem:[%s3 + $0x70] sm:$0xff]
        %v1009 = vld [vmem:[%s3 + $0x78] sm:$0xff]
        %v1010 = vld [vmem:[%s3 + $0x80] sm:$0xff]
        %v1011 = vld [vmem:[%s3 + $0x88] sm:$0xff]
        %v1012 = vld [vmem:[%s3 + $0x90] sm:$0xff]
        %v1013 = vld [vmem:[%s3 + $0x98] sm:$0xff]
        %v1014 = vld [vmem:[%s3 + $0xa0] sm:$0xff]
        %v1015 = vld [vmem:[%s3 + $0xa8] sm:$0xff]
        %v1016 = vld [vmem:[%s3 + $0xb0] sm:$0xff]
        %v1017 = vld [vmem:[%s3 + $0xb8] sm:$0xff]
        %v1018 = vld [vmem:[%s3 + $0xc0] sm:$0xff]
        %v1019 = vld [vmem:[%s3 + $0xc8] sm:$0xff]
        %v1020 = vld [vmem:[%s3 + $0xd0] sm:$0xff]
        %v1021 = vld [vmem:[%s3 + $0xd8] sm:$0xff]
        %v1022 = vld [vmem:[%s3 + $0xe0] sm:$0xff]
        %v1023 = vld [vmem:[%s3 + $0xe8] sm:$0xff]
        %v1024 = vld [vmem:[%s3 + $0xf0] sm:$0xff]
        %v1025 = vld [vmem:[%s3 + $0xf8] sm:$0xff]
        %v1026 = vld [vmem:[%s3 + $0x100] sm:$0xff]
        %v1027 = vld [vmem:[%s3 + $0x108] sm:$0xff]
        %v1028 = vld [vmem:[%s3 + $0x110] sm:$0xff]
        %v1029 = vld [vmem:[%s3 + $0x118] sm:$0xff]
        %v1030 = vld [vmem:[%s3 + $0x120] sm:$0xff]
        %v1031 = vld [vmem:[%s3 + $0x128] sm:$0xff]
        %v1032 = vld [vmem:[%s3 + $0x130] sm:$0xff]
        %v1033 = vld [vmem:[%s3 + $0x138] sm:$0xff]
        %v1034 = vld [vmem:[%s3 + $0x140] sm:$0xff]
        %v1035 = vld [vmem:[%s3 + $0x148] sm:$0xff]
        %v1036 = vld [vmem:[%s3 + $0x150] sm:$0xff]
        %v1037 = vld [vmem:[%s3 + $0x158] sm:$0xff]
        %v1038 = vld [vmem:[%s3 + $0x160] sm:$0xff]
        %v1039 = vld [vmem:[%s3 + $0x168] sm:$0xff]
        %v1040 = vld [vmem:[%s3 + $0x170] sm:$0xff]
        %v1041 = vld [vmem:[%s3 + $0x178] sm:$0xff]
        %v1042 = vld [vmem:[%s3 + $0x180] sm:$0xff]
        %v1043 = vld [vmem:[%s3 + $0x188] sm:$0xff]
        %v1044 = vld [vmem:[%s3 + $0x190] sm:$0xff]
        %v1045 = vld [vmem:[%s3 + $0x198] sm:$0xff]
        %v1046 = vld [vmem:[%s3 + $0x1a0] sm:$0xff]
        %v1047 = vld [vmem:[%s3 + $0x1a8] sm:$0xff]
        %v1048 = vld [vmem:[%s3 + $0x1b0] sm:$0xff]
        %v1049 = vld [vmem:[%s3 + $0x1b8] sm:$0xff]
        %v1050 = vld [vmem:[%s3 + $0x1c0] sm:$0xff]
        %v1051 = vld [vmem:[%s3 + $0x1c8] sm:$0xff]
        %v1052 = vld [vmem:[%s3 + $0x1d0] sm:$0xff]
        %v1053 = vld [vmem:[%s3 + $0x1d8] sm:$0xff]
        %v1054 = vld [vmem:[%s3 + $0x1e0] sm:$0xff]
        %v1055 = vld [vmem:[%s3 + $0x1e8] sm:$0xff]
        %v1056 = vld [vmem:[%s3 + $0x1f0] sm:$0xff]
        %v1057 = vld [vmem:[%s3 + $0x1f8] sm:$0xff]
        %v1058 = vld [vmem:[%s3 + $0x200] sm:$0xff]
        %v1059 = vld [vmem:[%s3 + $0x208] sm:$0xff]
        %v1060 = vld [vmem:[%s3 + $0x210] sm:$0xff]
        %v1061 = vld [vmem:[%s3 + $0x218] sm:$0xff]
        %v1062 = vld [vmem:[%s3 + $0x220] sm:$0xff]
        %v1063 = vld [vmem:[%s3 + $0x228] sm:$0xff]
        %v1064 = vld [vmem:[%s3 + $0x230] sm:$0xff]
        %v1065 = vld [vmem:[%s3 + $0x238] sm:$0xff]
        %v1066 = vld [vmem:[%s3 + $0x240] sm:$0xff]
        %v1067 = vld [vmem:[%s3 + $0x248] sm:$0xff]
        %v1068 = vld [vmem:[%s3 + $0x250] sm:$0xff]
        %v1144 = vunpack.c.l.b16 %v994
        %v1145 = vunpack.c.h.b16 %v994
        %v1146 = vunpack.c.l.b16 %v995
        %v1147 = vunpack.c.h.b16 %v995
        %v1148 = vunpack.c.l.b16 %v996
        %v1149 = vunpack.c.h.b16 %v996
        %v1150 = vunpack.c.l.b16 %v997
        %v1151 = vunpack.c.h.b16 %v997
        %v1152 = vunpack.c.l.b16 %v998
        %v1153 = vunpack.c.h.b16 %v998
        %v1154 = vunpack.c.l.b16 %v999
        %v1155 = vunpack.c.h.b16 %v999
        %v1156 = vunpack.c.l.b16 %v1000
        %v1157 = vunpack.c.h.b16 %v1000
        %v1158 = vunpack.c.l.b16 %v1001
        %v1159 = vunpack.c.h.b16 %v1001
        %v1160 = vunpack.c.l.b16 %v1002
        %v1161 = vunpack.c.h.b16 %v1002
        %v1162 = vunpack.c.l.b16 %v1003
        %v1163 = vunpack.c.h.b16 %v1003
        %v1164 = vunpack.c.l.b16 %v1004
        %v1165 = vunpack.c.h.b16 %v1004
        %v1166 = vunpack.c.l.b16 %v1005
        %v1167 = vunpack.c.h.b16 %v1005
        %v1168 = vunpack.c.l.b16 %v1006
        %v1169 = vunpack.c.h.b16 %v1006
        %v1170 = vunpack.c.l.b16 %v1007
        %v1171 = vunpack.c.h.b16 %v1007
        %v1172 = vunpack.c.l.b16 %v1008
        %v1173 = vunpack.c.h.b16 %v1008
        %v1174 = vunpack.c.l.b16 %v1009
        %v1175 = vunpack.c.h.b16 %v1009
        %v1176 = vunpack.c.l.b16 %v1010
        %v1177 = vunpack.c.h.b16 %v1010
        %v1178 = vunpack.c.l.b16 %v1011
        %v1179 = vunpack.c.h.b16 %v1011
        %v1180 = vunpack.c.l.b16 %v1012
        %v1181 = vunpack.c.h.b16 %v1012
        %v1182 = vunpack.c.l.b16 %v1013
        %v1183 = vunpack.c.h.b16 %v1013
        %v1184 = vunpack.c.l.b16 %v1014
        %v1185 = vunpack.c.h.b16 %v1014
        %v1186 = vunpack.c.l.b16 %v1015
        %v1187 = vunpack.c.h.b16 %v1015
        %v1188 = vunpack.c.l.b16 %v1016
        %v1189 = vunpack.c.h.b16 %v1016
        %v1190 = vunpack.c.l.b16 %v1017
        %v1191 = vunpack.c.h.b16 %v1017
        %v1192 = vunpack.c.l.b16 %v1018
        %v1193 = vunpack.c.h.b16 %v1018
        %v1194 = vunpack.c.l.b16 %v1019
        %v1195 = vunpack.c.h.b16 %v1019
        %v1196 = vunpack.c.l.b16 %v1020
        %v1197 = vunpack.c.h.b16 %v1020
        %v1198 = vunpack.c.l.b16 %v1021
        %v1199 = vunpack.c.h.b16 %v1021
        %v1200 = vunpack.c.l.b16 %v1022
        %v1201 = vunpack.c.h.b16 %v1022
        %v1202 = vunpack.c.l.b16 %v1023
        %v1203 = vunpack.c.h.b16 %v1023
        %v1204 = vunpack.c.l.b16 %v1024
        %v1205 = vunpack.c.h.b16 %v1024
        %v1206 = vunpack.c.l.b16 %v1025
        %v1207 = vunpack.c.h.b16 %v1025
        %v1208 = vunpack.c.l.b16 %v1026
        %v1209 = vunpack.c.h.b16 %v1026
        %v1210 = vunpack.c.l.b16 %v1027
        %v1211 = vunpack.c.h.b16 %v1027
        %v1212 = vunpack.c.l.b16 %v1028
        %v1213 = vunpack.c.h.b16 %v1028
        %v1214 = vunpack.c.l.b16 %v1029
        %v1215 = vunpack.c.h.b16 %v1029
        %v1216 = vunpack.c.l.b16 %v1030
        %v1217 = vunpack.c.h.b16 %v1030
        %v1218 = vunpack.c.l.b16 %v1031
        %v1219 = vunpack.c.h.b16 %v1031
        %v1220 = vunpack.c.l.b16 %v1032
        %v1221 = vunpack.c.h.b16 %v1032
        %v1222 = vunpack.c.l.b16 %v1033
        %v1223 = vunpack.c.h.b16 %v1033
        %v1224 = vunpack.c.l.b16 %v1034
        %v1225 = vunpack.c.h.b16 %v1034
        %v1226 = vunpack.c.l.b16 %v1035
        %v1227 = vunpack.c.h.b16 %v1035
        %v1228 = vunpack.c.l.b16 %v1036
        %v1229 = vunpack.c.h.b16 %v1036
        %v1230 = vunpack.c.l.b16 %v1037
        %v1231 = vunpack.c.h.b16 %v1037
        %v1232 = vunpack.c.l.b16 %v1038
        %v1233 = vunpack.c.h.b16 %v1038
        %v1234 = vunpack.c.l.b16 %v1039
        %v1235 = vunpack.c.h.b16 %v1039
        %v1236 = vunpack.c.l.b16 %v1040
        %v1237 = vunpack.c.h.b16 %v1040
        %v1238 = vunpack.c.l.b16 %v1041
        %v1239 = vunpack.c.h.b16 %v1041
        %v1240 = vunpack.c.l.b16 %v1042
        %v1241 = vunpack.c.h.b16 %v1042
        %v1242 = vunpack.c.l.b16 %v1043
        %v1243 = vunpack.c.h.b16 %v1043
        %v1244 = vunpack.c.l.b16 %v1044
        %v1245 = vunpack.c.h.b16 %v1044
        %v1246 = vunpack.c.l.b16 %v1045
        %v1247 = vunpack.c.h.b16 %v1045
        %v1248 = vunpack.c.l.b16 %v1046
        %v1249 = vunpack.c.h.b16 %v1046
        %v1250 = vunpack.c.l.b16 %v1047
        %v1251 = vunpack.c.h.b16 %v1047
        %v1252 = vunpack.c.l.b16 %v1048
        %v1253 = vunpack.c.h.b16 %v1048
        %v1254 = vunpack.c.l.b16 %v1049
        %v1255 = vunpack.c.h.b16 %v1049
        %v1256 = vunpack.c.l.b16 %v1050
        %v1257 = vunpack.c.h.b16 %v1050
        %v1258 = vunpack.c.l.b16 %v1051
        %v1259 = vunpack.c.h.b16 %v1051
        %v1260 = vunpack.c.l.b16 %v1052
        %v1261 = vunpack.c.h.b16 %v1052
        %v1262 = vunpack.c.l.b16 %v1053
        %v1263 = vunpack.c.h.b16 %v1053
        %v1264 = vunpack.c.l.b16 %v1054
        %v1265 = vunpack.c.h.b16 %v1054
        %v1266 = vunpack.c.l.b16 %v1055
        %v1267 = vunpack.c.h.b16 %v1055
        %v1268 = vunpack.c.l.b16 %v1056
        %v1269 = vunpack.c.h.b16 %v1056
        %v1270 = vunpack.c.l.b16 %v1057
        %v1271 = vunpack.c.h.b16 %v1057
        %v1272 = vunpack.c.l.b16 %v1058
        %v1273 = vunpack.c.h.b16 %v1058
        %v1274 = vunpack.c.l.b16 %v1059
        %v1275 = vunpack.c.h.b16 %v1059
        %v1276 = vunpack.c.l.b16 %v1060
        %v1277 = vunpack.c.h.b16 %v1060
        %v1278 = vunpack.c.l.b16 %v1061
        %v1279 = vunpack.c.h.b16 %v1061
        %v1280 = vunpack.c.l.b16 %v1062
        %v1281 = vunpack.c.h.b16 %v1062
        %v1282 = vunpack.c.l.b16 %v1063
        %v1283 = vunpack.c.h.b16 %v1063
        %v1284 = vunpack.c.l.b16 %v1064
        %v1285 = vunpack.c.h.b16 %v1064
        %v1286 = vunpack.c.l.b16 %v1065
        %v1287 = vunpack.c.h.b16 %v1065
        %v1288 = vunpack.c.l.b16 %v1066
        %v1289 = vunpack.c.h.b16 %v1066
        %v1290 = vunpack.c.l.b16 %v1067
        %v1291 = vunpack.c.h.b16 %v1067
        %v1292 = vunpack.c.l.b16 %v1068
        %v1293 = vunpack.c.h.b16 %v1068
        %v1294 = vpack.c.b16 %v1146, %v1144
        %v1295 = vpack.c.b16 %v1147, %v1145
        %v1296 = vpack.c.b16 %v1150, %v1148
        %v1297 = vpack.c.b16 %v1151, %v1149
        %v1298 = vpack.c.b16 %v1154, %v1152
        %v1299 = vpack.c.b16 %v1155, %v1153
        %v1300 = vpack.c.b16 %v1158, %v1156
        %v1301 = vpack.c.b16 %v1159, %v1157
        %v1302 = vpack.c.b16 %v1162, %v1160
        %v1303 = vpack.c.b16 %v1163, %v1161
        %v1304 = vpack.c.b16 %v1166, %v1164
        %v1305 = vpack.c.b16 %v1167, %v1165
        %v1306 = vpack.c.b16 %v1170, %v1168
        %v1307 = vpack.c.b16 %v1171, %v1169
        %v1308 = vpack.c.b16 %v1174, %v1172
        %v1309 = vpack.c.b16 %v1175, %v1173
        %v1310 = vpack.c.b16 %v1178, %v1176
        %v1311 = vpack.c.b16 %v1179, %v1177
        %v1312 = vpack.c.b16 %v1182, %v1180
        %v1313 = vpack.c.b16 %v1183, %v1181
        %v1314 = vpack.c.b16 %v1186, %v1184
        %v1315 = vpack.c.b16 %v1187, %v1185
        %v1316 = vpack.c.b16 %v1190, %v1188
        %v1317 = vpack.c.b16 %v1191, %v1189
        %v1318 = vpack.c.b16 %v1194, %v1192
        %v1319 = vpack.c.b16 %v1195, %v1193
        %v1320 = vpack.c.b16 %v1198, %v1196
        %v1321 = vpack.c.b16 %v1199, %v1197
        %v1322 = vpack.c.b16 %v1202, %v1200
        %v1323 = vpack.c.b16 %v1203, %v1201
        %v1324 = vpack.c.b16 %v1206, %v1204
        %v1325 = vpack.c.b16 %v1207, %v1205
        %v1326 = vpack.c.b16 %v1210, %v1208
        %v1327 = vpack.c.b16 %v1211, %v1209
        %v1328 = vpack.c.b16 %v1214, %v1212
        %v1329 = vpack.c.b16 %v1215, %v1213
        %v1330 = vpack.c.b16 %v1218, %v1216
        %v1331 = vpack.c.b16 %v1219, %v1217
        %v1332 = vpack.c.b16 %v1222, %v1220
        %v1333 = vpack.c.b16 %v1223, %v1221
        %v1334 = vpack.c.b16 %v1226, %v1224
        %v1335 = vpack.c.b16 %v1227, %v1225
        %v1336 = vpack.c.b16 %v1230, %v1228
        %v1337 = vpack.c.b16 %v1231, %v1229
        %v1338 = vpack.c.b16 %v1234, %v1232
        %v1339 = vpack.c.b16 %v1235, %v1233
        %v1340 = vpack.c.b16 %v1238, %v1236
        %v1341 = vpack.c.b16 %v1239, %v1237
        %v1342 = vpack.c.b16 %v1242, %v1240
        %v1343 = vpack.c.b16 %v1243, %v1241
        %v1344 = vpack.c.b16 %v1246, %v1244
        %v1345 = vpack.c.b16 %v1247, %v1245
        %v1346 = vpack.c.b16 %v1250, %v1248
        %v1347 = vpack.c.b16 %v1251, %v1249
        %v1348 = vpack.c.b16 %v1254, %v1252
        %v1349 = vpack.c.b16 %v1255, %v1253
        %v1350 = vpack.c.b16 %v1258, %v1256
        %v1351 = vpack.c.b16 %v1259, %v1257
        %v1352 = vpack.c.b16 %v1262, %v1260
        %v1353 = vpack.c.b16 %v1263, %v1261
        %v1354 = vpack.c.b16 %v1266, %v1264
        %v1355 = vpack.c.b16 %v1267, %v1265
        %v1356 = vpack.c.b16 %v1270, %v1268
        %v1357 = vpack.c.b16 %v1271, %v1269
        %v1358 = vpack.c.b16 %v1274, %v1272
        %v1359 = vpack.c.b16 %v1275, %v1273
        %v1360 = vpack.c.b16 %v1278, %v1276
        %v1361 = vpack.c.b16 %v1279, %v1277
        %v1362 = vpack.c.b16 %v1282, %v1280
        %v1363 = vpack.c.b16 %v1283, %v1281
        %v1364 = vpack.c.b16 %v1286, %v1284
        %v1365 = vpack.c.b16 %v1287, %v1285
        %v1366 = vpack.c.b16 %v1290, %v1288
        %v1367 = vpack.c.b16 %v1291, %v1289
        %v1368 = vpack.c.b16 %v1292, %v1292
        %v1369 = vpack.c.b16 %v1293, %v1293
        %vm1444 = vcmask 719872
        %v1445 = vsel %vm1444, %v949, 0
        %v1447 = vsel %vm1444, %v951, 0
        %v1449 = vsel %vm1444, %v953, 0
        %vm1451 = vcmask 1043456
        %v1453 = vsel %vm1451, %v1368, 0
        %v1456 = vsel %vm1451, %v1369, 0
        %1458 = vmatprep.subr.bf16.mxu0 %v1309
        %1459 = vmatpush1.bf16.msra.mxu0 %v1308
        %1460 = vmatprep.subr.bf16.mxu0 %v1307
        %1461 = vmatpush1.bf16.msra.mxu0 %v1306
        %1462 = vmatprep.subr.bf16.mxu0 %v1305
        %1463 = vmatpush1.bf16.msra.mxu0 %v1304
        %1464 = vmatprep.subr.bf16.mxu0 %v1303
        %1465 = vmatpush1.bf16.msra.mxu0 %v1302
        %1466 = vmatprep.subr.bf16.mxu0 %v1301
        %1467 = vmatpush1.bf16.msra.mxu0 %v1300
        %1468 = vmatprep.subr.bf16.mxu0 %v1299
        %1469 = vmatpush1.bf16.msra.mxu0 %v1298
        %1470 = vmatprep.subr.bf16.mxu0 %v1297
        %1471 = vmatpush1.bf16.msra.mxu0 %v1296
        %1472 = vmatprep.subr.bf16.mxu0 %v1295
        %1473 = vmatpush1.bf16.msra.mxu0 %v1294
        %1474 = vmatprep.subr.bf16.mxu0 %v1325
        %1475 = vmatpush2.bf16.msra.mxu0 %v1324
        %1476 = vmatprep.subr.bf16.mxu0 %v1323
        %1477 = vmatpush2.bf16.msra.mxu0 %v1322
        %1478 = vmatprep.subr.bf16.mxu0 %v1321
        %1479 = vmatpush2.bf16.msra.mxu0 %v1320
        %1480 = vmatprep.subr.bf16.mxu0 %v1319
        %1481 = vmatpush2.bf16.msra.mxu0 %v1318
        %1482 = vmatprep.subr.bf16.mxu0 %v1317
        %1483 = vmatpush2.bf16.msra.mxu0 %v1316
        %1484 = vmatprep.subr.bf16.mxu0 %v1315
        %1485 = vmatpush2.bf16.msra.mxu0 %v1314
        %1486 = vmatprep.subr.bf16.mxu0 %v1313
        %1487 = vmatpush2.bf16.msra.mxu0 %v1312
        %1488 = vmatprep.subr.bf16.mxu0 %v1311
        %1489 = vmatpush2.bf16.msra.mxu0 %v1310
        %1490 = vmatprep.mubr.bf16.mxu0 %v966
        %1491 = vmatmul.mubr.bf16.gmra.mxu0 %v956
        %v1492 = vpop.f32.mrf.mxu0
        %v1493 = vadd.f32 0.0, %v1492
        %v1494 = vpop.f32.mrf.mxu0
        %v1495 = vadd.f32 0.0, %v1494
        %v1496 = vpop.f32.mrf.mxu0
        %v1497 = vadd.f32 0.0, %v1496
        %v1498 = vpop.f32.mrf.mxu0
        %v1499 = vadd.f32 0.0, %v1498
        %1500 = vmatprep.mubr.bf16.mxu0 %v969
        %1501 = vmatmul.mubr.bf16.gmra.mxu0 %v959
        %v1502 = vpop.f32.mrf.mxu0
        %v1503 = vadd.f32 0.0, %v1502
        %v1504 = vpop.f32.mrf.mxu0
        %v1505 = vadd.f32 0.0, %v1504
        %v1506 = vpop.f32.mrf.mxu0
        %v1507 = vadd.f32 0.0, %v1506
        %v1508 = vpop.f32.mrf.mxu0
        %v1509 = vadd.f32 0.0, %v1508
        %1510 = vmatprep.mubr.bf16.mxu0 %v972
        %1511 = vmatmul.mubr.bf16.gmra.mxu0 %v962
        %v1512 = vpop.f32.mrf.mxu0
        %v1513 = vadd.f32 0.0, %v1512
        %v1514 = vpop.f32.mrf.mxu0
        %v1515 = vadd.f32 0.0, %v1514
        %v1516 = vpop.f32.mrf.mxu0
        %v1517 = vadd.f32 0.0, %v1516
        %v1518 = vpop.f32.mrf.mxu0
        %v1519 = vadd.f32 0.0, %v1518
        %1520 = vdwg.mxu0
        %1521 = vmatprep.subr.bf16.mxu0 %v1341
        %1522 = vmatpush1.bf16.msra.mxu0 %v1340
        %1523 = vmatprep.subr.bf16.mxu0 %v1339
        %1524 = vmatpush1.bf16.msra.mxu0 %v1338
        %1525 = vmatprep.subr.bf16.mxu0 %v1337
        %1526 = vmatpush1.bf16.msra.mxu0 %v1336
        %1527 = vmatprep.subr.bf16.mxu0 %v1335
        %1528 = vmatpush1.bf16.msra.mxu0 %v1334
        %1529 = vmatprep.subr.bf16.mxu0 %v1333
        %1530 = vmatpush1.bf16.msra.mxu0 %v1332
        %1531 = vmatprep.subr.bf16.mxu0 %v1331
        %1532 = vmatpush1.bf16.msra.mxu0 %v1330
        %1533 = vmatprep.subr.bf16.mxu0 %v1329
        %1534 = vmatpush1.bf16.msra.mxu0 %v1328
        %1535 = vmatprep.subr.bf16.mxu0 %v1327
        %1536 = vmatpush1.bf16.msra.mxu0 %v1326
        %1537 = vmatprep.subr.bf16.mxu0 %v1357
        %1538 = vmatpush2.bf16.msra.mxu0 %v1356
        %1539 = vmatprep.subr.bf16.mxu0 %v1355
        %1540 = vmatpush2.bf16.msra.mxu0 %v1354
        %1541 = vmatprep.subr.bf16.mxu0 %v1353
        %1542 = vmatpush2.bf16.msra.mxu0 %v1352
        %1543 = vmatprep.subr.bf16.mxu0 %v1351
        %1544 = vmatpush2.bf16.msra.mxu0 %v1350
        %1545 = vmatprep.subr.bf16.mxu0 %v1349
        %1546 = vmatpush2.bf16.msra.mxu0 %v1348
        %1547 = vmatprep.subr.bf16.mxu0 %v1347
        %1548 = vmatpush2.bf16.msra.mxu0 %v1346
        %1549 = vmatprep.subr.bf16.mxu0 %v1345
        %1550 = vmatpush2.bf16.msra.mxu0 %v1344
        %1551 = vmatprep.subr.bf16.mxu0 %v1343
        %1552 = vmatpush2.bf16.msra.mxu0 %v1342
        %1553 = vmatprep.mubr.bf16.mxu0 %v986
        %1554 = vmatmul.mubr.bf16.gmra.mxu0 %v976
        %v1555 = vpop.f32.mrf.mxu0
        %v1556 = vadd.f32 %v1493, %v1555
        %v1557 = vpop.f32.mrf.mxu0
        %v1558 = vadd.f32 %v1495, %v1557
        %v1559 = vpop.f32.mrf.mxu0
        %v1560 = vadd.f32 %v1497, %v1559
        %v1561 = vpop.f32.mrf.mxu0
        %v1562 = vadd.f32 %v1499, %v1561
        %1563 = vmatprep.mubr.bf16.mxu0 %v989
        %1564 = vmatmul.mubr.bf16.gmra.mxu0 %v979
        %v1565 = vpop.f32.mrf.mxu0
        %v1566 = vadd.f32 %v1503, %v1565
        %v1567 = vpop.f32.mrf.mxu0
        %v1568 = vadd.f32 %v1505, %v1567
        %v1569 = vpop.f32.mrf.mxu0
        %v1570 = vadd.f32 %v1507, %v1569
        %v1571 = vpop.f32.mrf.mxu0
        %v1572 = vadd.f32 %v1509, %v1571
        %1573 = vmatprep.mubr.bf16.mxu0 %v992
        %1574 = vmatmul.mubr.bf16.gmra.mxu0 %v982
        %v1575 = vpop.f32.mrf.mxu0
        %v1576 = vadd.f32 %v1513, %v1575
        %v1577 = vpop.f32.mrf.mxu0
        %v1578 = vadd.f32 %v1515, %v1577
        %v1579 = vpop.f32.mrf.mxu0
        %v1580 = vadd.f32 %v1517, %v1579
        %v1581 = vpop.f32.mrf.mxu0
        %v1582 = vadd.f32 %v1519, %v1581
        %1583 = vdwg.mxu0
        %1584 = vmatprep.subr.bf16.mxu0 0
        %1585 = vmatpush1.bf16.msra.mxu0 0
        %1586 = vmatprep.subr.bf16.mxu0 0
        %1587 = vmatpush1.bf16.msra.mxu0 0
        %1588 = vmatprep.subr.bf16.mxu0 %v1456
        %1589 = vmatpush1.bf16.msra.mxu0 %v1453
        %1590 = vmatprep.subr.bf16.mxu0 %v1367
        %1591 = vmatpush1.bf16.msra.mxu0 %v1366
        %1592 = vmatprep.subr.bf16.mxu0 %v1365
        %1593 = vmatpush1.bf16.msra.mxu0 %v1364
        %1594 = vmatprep.subr.bf16.mxu0 %v1363
        %1595 = vmatpush1.bf16.msra.mxu0 %v1362
        %1596 = vmatprep.subr.bf16.mxu0 %v1361
        %1597 = vmatpush1.bf16.msra.mxu0 %v1360
        %1598 = vmatprep.subr.bf16.mxu0 %v1359
        %1599 = vmatpush1.bf16.msra.mxu0 %v1358
        %1600 = vmatprep.subr.bf16.mxu0 0
        %1601 = vmatpush2.bf16.msra.mxu0 0
        %1602 = vmatprep.subr.bf16.mxu0 0
        %1603 = vmatpush2.bf16.msra.mxu0 0
        %1604 = vmatprep.subr.bf16.mxu0 0
        %1605 = vmatpush2.bf16.msra.mxu0 0
        %1606 = vmatprep.subr.bf16.mxu0 0
        %1607 = vmatpush2.bf16.msra.mxu0 0
        %1608 = vmatprep.subr.bf16.mxu0 0
        %1609 = vmatpush2.bf16.msra.mxu0 0
        %1610 = vmatprep.subr.bf16.mxu0 0
        %1611 = vmatpush2.bf16.msra.mxu0 0
        %1612 = vmatprep.subr.bf16.mxu0 0
        %1613 = vmatpush2.bf16.msra.mxu0 0
        %1614 = vmatprep.subr.bf16.mxu0 0
        %1615 = vmatpush2.bf16.msra.mxu0 0
        %1616 = vmatprep.mubr.bf16.mxu0 0
        %1617 = vmatmul.mubr.bf16.gmra.mxu0 %v1445
        %v1618 = vpop.f32.mrf.mxu0
        %v1619 = vadd.f32 %v1556, %v1618
        %v1620 = vpop.f32.mrf.mxu0
        %v1621 = vadd.f32 %v1558, %v1620
        %v1622 = vpop.f32.mrf.mxu0
        %v1623 = vadd.f32 %v1560, %v1622
        %v1624 = vpop.f32.mrf.mxu0
        %v1625 = vadd.f32 %v1562, %v1624
        %1626 = vmatprep.mubr.bf16.mxu0 0
        %1627 = vmatmul.mubr.bf16.gmra.mxu0 %v1447
        %v1628 = vpop.f32.mrf.mxu0
        %v1629 = vadd.f32 %v1566, %v1628
        %v1630 = vpop.f32.mrf.mxu0
        %v1631 = vadd.f32 %v1568, %v1630
        %v1632 = vpop.f32.mrf.mxu0
        %v1633 = vadd.f32 %v1570, %v1632
        %v1634 = vpop.f32.mrf.mxu0
        %v1635 = vadd.f32 %v1572, %v1634
        %1636 = vmatprep.mubr.bf16.mxu0 0
        %1637 = vmatmul.mubr.bf16.gmra.mxu0 %v1449
        %v1638 = vpop.f32.mrf.mxu0
        %v1639 = vadd.f32 %v1576, %v1638
        %v1640 = vpop.f32.mrf.mxu0
        %v1641 = vadd.f32 %v1578, %v1640
        %v1642 = vpop.f32.mrf.mxu0
        %v1643 = vadd.f32 %v1580, %v1642
        %v1644 = vpop.f32.mrf.mxu0
        %v1645 = vadd.f32 %v1582, %v1644
        %1646 = vdwg.mxu0
        %v1647 = vshrl.u32 %v956, 16
        %v1649 = vshll.u32 %v956, 16
        %v1651 = vrot.slane %v1649, 1
        %v1652 = vor.u32 %v1647, %v1651
        %v1653 = vshll.u32 %v959, 16
        %v1655 = vrot.slane %v1653, 1
        %v1656 = vsel %vm879, %v1652, %v1655
        %v1657 = vshrl.u32 %v966, 16
        %v1659 = vshll.u32 %v966, 16
        %v1661 = vrot.slane %v1659, 1
        %v1662 = vor.u32 %v1657, %v1661
        %v1663 = vshll.u32 %v969, 16
        %v1665 = vrot.slane %v1663, 1
        %v1666 = vsel %vm879, %v1662, %v1665
        %v1667 = vshrl.u32 %v976, 16
        %v1669 = vshll.u32 %v976, 16
        %v1671 = vrot.slane %v1669, 1
        %v1672 = vor.u32 %v1667, %v1671
        %v1673 = vshll.u32 %v979, 16
        %v1675 = vrot.slane %v1673, 1
        %v1676 = vsel %vm879, %v1672, %v1675
        %v1677 = vshrl.u32 %v986, 16
        %v1679 = vshll.u32 %v986, 16
        %v1681 = vrot.slane %v1679, 1
        %v1682 = vor.u32 %v1677, %v1681
        %v1683 = vshll.u32 %v989, 16
        %v1685 = vrot.slane %v1683, 1
        %v1686 = vsel %vm879, %v1682, %v1685
        %v1687 = vshrl.u32 %v949, 16
        %v1689 = vshll.u32 %v949, 16
        %v1691 = vrot.slane %v1689, 1
        %v1692 = vor.u32 %v1687, %v1691
        %v1693 = vshll.u32 %v951, 16
        %v1695 = vrot.slane %v1693, 1
        %v1696 = vsel %vm879, %v1692, %v1695
        %v1697 = vshrl.u32 %v959, 16
        %v1699 = vor.u32 %v1697, %v1655
        %v1700 = vshll.u32 %v962, 16
        %v1702 = vrot.slane %v1700, 1
        %v1703 = vsel %vm879, %v1699, %v1702
        %v1704 = vshrl.u32 %v969, 16
        %v1706 = vor.u32 %v1704, %v1665
        %v1707 = vshll.u32 %v972, 16
        %v1709 = vrot.slane %v1707, 1
        %v1710 = vsel %vm879, %v1706, %v1709
        %v1711 = vshrl.u32 %v979, 16
        %v1713 = vor.u32 %v1711, %v1675
        %v1714 = vshll.u32 %v982, 16
        %v1716 = vrot.slane %v1714, 1
        %v1717 = vsel %vm879, %v1713, %v1716
        %v1718 = vshrl.u32 %v989, 16
        %v1720 = vor.u32 %v1718, %v1685
        %v1721 = vshll.u32 %v992, 16
        %v1723 = vrot.slane %v1721, 1
        %v1724 = vsel %vm879, %v1720, %v1723
        %v1725 = vshrl.u32 %v951, 16
        %v1727 = vor.u32 %v1725, %v1695
        %v1728 = vshll.u32 %v953, 16
        %v1730 = vrot.slane %v1728, 1
        %v1731 = vsel %vm879, %v1727, %v1730
        %v1732 = vshrl.u32 %v962, 16
        %v1734 = vor.u32 %v1732, %v1702
        %v1735 = vshrl.u32 %v972, 16
        %v1737 = vor.u32 %v1735, %v1709
        %v1738 = vshrl.u32 %v982, 16
        %v1740 = vor.u32 %v1738, %v1716
        %v1741 = vshrl.u32 %v992, 16
        %v1743 = vor.u32 %v1741, %v1723
        %v1744 = vshrl.u32 %v953, 16
        %v1746 = vor.u32 %v1744, %v1730
        %v1760 = vsel %vm1444, %v1696, 0
        %v1763 = vsel %vm1444, %v1731, 0
        %v1766 = vsel %vm1444, %v1746, 0
        %1768 = vmatprep.subr.bf16.mxu0 %v1309
        %1769 = vmatpush1.bf16.msra.mxu0 %v1308
        %1770 = vmatprep.subr.bf16.mxu0 %v1307
        %1771 = vmatpush1.bf16.msra.mxu0 %v1306
        %1772 = vmatprep.subr.bf16.mxu0 %v1305
        %1773 = vmatpush1.bf16.msra.mxu0 %v1304
        %1774 = vmatprep.subr.bf16.mxu0 %v1303
        %1775 = vmatpush1.bf16.msra.mxu0 %v1302
        %1776 = vmatprep.subr.bf16.mxu0 %v1301
        %1777 = vmatpush1.bf16.msra.mxu0 %v1300
        %1778 = vmatprep.subr.bf16.mxu0 %v1299
        %1779 = vmatpush1.bf16.msra.mxu0 %v1298
        %1780 = vmatprep.subr.bf16.mxu0 %v1297
        %1781 = vmatpush1.bf16.msra.mxu0 %v1296
        %1782 = vmatprep.subr.bf16.mxu0 %v1295
        %1783 = vmatpush1.bf16.msra.mxu0 %v1294
        %1784 = vmatprep.subr.bf16.mxu0 %v1325
        %1785 = vmatpush2.bf16.msra.mxu0 %v1324
        %1786 = vmatprep.subr.bf16.mxu0 %v1323
        %1787 = vmatpush2.bf16.msra.mxu0 %v1322
        %1788 = vmatprep.subr.bf16.mxu0 %v1321
        %1789 = vmatpush2.bf16.msra.mxu0 %v1320
        %1790 = vmatprep.subr.bf16.mxu0 %v1319
        %1791 = vmatpush2.bf16.msra.mxu0 %v1318
        %1792 = vmatprep.subr.bf16.mxu0 %v1317
        %1793 = vmatpush2.bf16.msra.mxu0 %v1316
        %1794 = vmatprep.subr.bf16.mxu0 %v1315
        %1795 = vmatpush2.bf16.msra.mxu0 %v1314
        %1796 = vmatprep.subr.bf16.mxu0 %v1313
        %1797 = vmatpush2.bf16.msra.mxu0 %v1312
        %1798 = vmatprep.subr.bf16.mxu0 %v1311
        %1799 = vmatpush2.bf16.msra.mxu0 %v1310
        %1800 = vmatprep.mubr.bf16.mxu0 %v1666
        %1801 = vmatmul.mubr.bf16.gmra.mxu0 %v1656
        %v1802 = vpop.f32.mrf.mxu0
        %v1803 = vadd.f32 0.0, %v1802
        %v1804 = vpop.f32.mrf.mxu0
        %v1805 = vadd.f32 0.0, %v1804
        %v1806 = vpop.f32.mrf.mxu0
        %v1807 = vadd.f32 0.0, %v1806
        %v1808 = vpop.f32.mrf.mxu0
        %v1809 = vadd.f32 0.0, %v1808
        %1810 = vmatprep.mubr.bf16.mxu0 %v1710
        %1811 = vmatmul.mubr.bf16.gmra.mxu0 %v1703
        %v1812 = vpop.f32.mrf.mxu0
        %v1813 = vadd.f32 0.0, %v1812
        %v1814 = vpop.f32.mrf.mxu0
        %v1815 = vadd.f32 0.0, %v1814
        %v1816 = vpop.f32.mrf.mxu0
        %v1817 = vadd.f32 0.0, %v1816
        %v1818 = vpop.f32.mrf.mxu0
        %v1819 = vadd.f32 0.0, %v1818
        %1820 = vmatprep.mubr.bf16.mxu0 %v1737
        %1821 = vmatmul.mubr.bf16.gmra.mxu0 %v1734
        %v1822 = vpop.f32.mrf.mxu0
        %v1823 = vadd.f32 0.0, %v1822
        %v1824 = vpop.f32.mrf.mxu0
        %v1825 = vadd.f32 0.0, %v1824
        %v1826 = vpop.f32.mrf.mxu0
        %v1827 = vadd.f32 0.0, %v1826
        %v1828 = vpop.f32.mrf.mxu0
        %v1829 = vadd.f32 0.0, %v1828
        %1830 = vdwg.mxu0
        %1831 = vmatprep.subr.bf16.mxu0 %v1341
        %1832 = vmatpush1.bf16.msra.mxu0 %v1340
        %1833 = vmatprep.subr.bf16.mxu0 %v1339
        %1834 = vmatpush1.bf16.msra.mxu0 %v1338
        %1835 = vmatprep.subr.bf16.mxu0 %v1337
        %1836 = vmatpush1.bf16.msra.mxu0 %v1336
        %1837 = vmatprep.subr.bf16.mxu0 %v1335
        %1838 = vmatpush1.bf16.msra.mxu0 %v1334
        %1839 = vmatprep.subr.bf16.mxu0 %v1333
        %1840 = vmatpush1.bf16.msra.mxu0 %v1332
        %1841 = vmatprep.subr.bf16.mxu0 %v1331
        %1842 = vmatpush1.bf16.msra.mxu0 %v1330
        %1843 = vmatprep.subr.bf16.mxu0 %v1329
        %1844 = vmatpush1.bf16.msra.mxu0 %v1328
        %1845 = vmatprep.subr.bf16.mxu0 %v1327
        %1846 = vmatpush1.bf16.msra.mxu0 %v1326
        %1847 = vmatprep.subr.bf16.mxu0 %v1357
        %1848 = vmatpush2.bf16.msra.mxu0 %v1356
        %1849 = vmatprep.subr.bf16.mxu0 %v1355
        %1850 = vmatpush2.bf16.msra.mxu0 %v1354
        %1851 = vmatprep.subr.bf16.mxu0 %v1353
        %1852 = vmatpush2.bf16.msra.mxu0 %v1352
        %1853 = vmatprep.subr.bf16.mxu0 %v1351
        %1854 = vmatpush2.bf16.msra.mxu0 %v1350
        %1855 = vmatprep.subr.bf16.mxu0 %v1349
        %1856 = vmatpush2.bf16.msra.mxu0 %v1348
        %1857 = vmatprep.subr.bf16.mxu0 %v1347
        %1858 = vmatpush2.bf16.msra.mxu0 %v1346
        %1859 = vmatprep.subr.bf16.mxu0 %v1345
        %1860 = vmatpush2.bf16.msra.mxu0 %v1344
        %1861 = vmatprep.subr.bf16.mxu0 %v1343
        %1862 = vmatpush2.bf16.msra.mxu0 %v1342
        %1863 = vmatprep.mubr.bf16.mxu0 %v1686
        %1864 = vmatmul.mubr.bf16.gmra.mxu0 %v1676
        %v1865 = vpop.f32.mrf.mxu0
        %v1866 = vadd.f32 %v1803, %v1865
        %v1867 = vpop.f32.mrf.mxu0
        %v1868 = vadd.f32 %v1805, %v1867
        %v1869 = vpop.f32.mrf.mxu0
        %v1870 = vadd.f32 %v1807, %v1869
        %v1871 = vpop.f32.mrf.mxu0
        %v1872 = vadd.f32 %v1809, %v1871
        %1873 = vmatprep.mubr.bf16.mxu0 %v1724
        %1874 = vmatmul.mubr.bf16.gmra.mxu0 %v1717
        %v1875 = vpop.f32.mrf.mxu0
        %v1876 = vadd.f32 %v1813, %v1875
        %v1877 = vpop.f32.mrf.mxu0
        %v1878 = vadd.f32 %v1815, %v1877
        %v1879 = vpop.f32.mrf.mxu0
        %v1880 = vadd.f32 %v1817, %v1879
        %v1881 = vpop.f32.mrf.mxu0
        %v1882 = vadd.f32 %v1819, %v1881
        %1883 = vmatprep.mubr.bf16.mxu0 %v1743
        %1884 = vmatmul.mubr.bf16.gmra.mxu0 %v1740
        %v1885 = vpop.f32.mrf.mxu0
        %v1886 = vadd.f32 %v1823, %v1885
        %v1887 = vpop.f32.mrf.mxu0
        %v1888 = vadd.f32 %v1825, %v1887
        %v1889 = vpop.f32.mrf.mxu0
        %v1890 = vadd.f32 %v1827, %v1889
        %v1891 = vpop.f32.mrf.mxu0
        %v1892 = vadd.f32 %v1829, %v1891
        %1893 = vdwg.mxu0
        %1894 = vmatprep.subr.bf16.mxu0 0
        %1895 = vmatpush1.bf16.msra.mxu0 0
        %1896 = vmatprep.subr.bf16.mxu0 0
        %1897 = vmatpush1.bf16.msra.mxu0 0
        %1898 = vmatprep.subr.bf16.mxu0 %v1456
        %1899 = vmatpush1.bf16.msra.mxu0 %v1453
        %1900 = vmatprep.subr.bf16.mxu0 %v1367
        %1901 = vmatpush1.bf16.msra.mxu0 %v1366
        %1902 = vmatprep.subr.bf16.mxu0 %v1365
        %1903 = vmatpush1.bf16.msra.mxu0 %v1364
        %1904 = vmatprep.subr.bf16.mxu0 %v1363
        %1905 = vmatpush1.bf16.msra.mxu0 %v1362
        %1906 = vmatprep.subr.bf16.mxu0 %v1361
        %1907 = vmatpush1.bf16.msra.mxu0 %v1360
        %1908 = vmatprep.subr.bf16.mxu0 %v1359
        %1909 = vmatpush1.bf16.msra.mxu0 %v1358
        %1910 = vmatprep.subr.bf16.mxu0 0
        %1911 = vmatpush2.bf16.msra.mxu0 0
        %1912 = vmatprep.subr.bf16.mxu0 0
        %1913 = vmatpush2.bf16.msra.mxu0 0
        %1914 = vmatprep.subr.bf16.mxu0 0
        %1915 = vmatpush2.bf16.msra.mxu0 0
        %1916 = vmatprep.subr.bf16.mxu0 0
        %1917 = vmatpush2.bf16.msra.mxu0 0
        %1918 = vmatprep.subr.bf16.mxu0 0
        %1919 = vmatpush2.bf16.msra.mxu0 0
        %1920 = vmatprep.subr.bf16.mxu0 0
        %1921 = vmatpush2.bf16.msra.mxu0 0
        %1922 = vmatprep.subr.bf16.mxu0 0
        %1923 = vmatpush2.bf16.msra.mxu0 0
        %1924 = vmatprep.subr.bf16.mxu0 0
        %1925 = vmatpush2.bf16.msra.mxu0 0
        %1926 = vmatprep.mubr.bf16.mxu0 0
        %1927 = vmatmul.mubr.bf16.gmra.mxu0 %v1760
        %v1928 = vpop.f32.mrf.mxu0
        %v1929 = vadd.f32 %v1866, %v1928
        %v1930 = vpop.f32.mrf.mxu0
        %v1931 = vadd.f32 %v1868, %v1930
        %v1932 = vpop.f32.mrf.mxu0
        %v1933 = vadd.f32 %v1870, %v1932
        %v1934 = vpop.f32.mrf.mxu0
        %v1935 = vadd.f32 %v1872, %v1934
        %1936 = vmatprep.mubr.bf16.mxu0 0
        %1937 = vmatmul.mubr.bf16.gmra.mxu0 %v1763
        %v1938 = vpop.f32.mrf.mxu0
        %v1939 = vadd.f32 %v1876, %v1938
        %v1940 = vpop.f32.mrf.mxu0
        %v1941 = vadd.f32 %v1878, %v1940
        %v1942 = vpop.f32.mrf.mxu0
        %v1943 = vadd.f32 %v1880, %v1942
        %v1944 = vpop.f32.mrf.mxu0
        %v1945 = vadd.f32 %v1882, %v1944
        %1946 = vmatprep.mubr.bf16.mxu0 0
        %1947 = vmatmul.mubr.bf16.gmra.mxu0 %v1766
        %v1948 = vpop.f32.mrf.mxu0
        %v1949 = vadd.f32 %v1886, %v1948
        %v1950 = vpop.f32.mrf.mxu0
        %v1951 = vadd.f32 %v1888, %v1950
        %v1952 = vpop.f32.mrf.mxu0
        %v1953 = vadd.f32 %v1890, %v1952
        %v1954 = vpop.f32.mrf.mxu0
        %v1955 = vadd.f32 %v1892, %v1954
        %1956 = vdwg.mxu0
        %1969 = vrot.lane.b32.xlu0 %v1619, 48
        %v1970 = vpop.permute.xlu0 %1969
        %1971 = vrot.lane.b32.xlu0 %v1621, 48
        %v1972 = vpop.permute.xlu0 %1971
        %1973 = vrot.lane.b32.xlu0 %v1623, 48
        %v1974 = vpop.permute.xlu0 %1973
        %1975 = vrot.lane.b32.xlu0 %v1625, 48
        %v1976 = vpop.permute.xlu0 %1975
        %1977 = vrot.lane.b32.xlu0 %v1629, 48
        %v1978 = vpop.permute.xlu0 %1977
        %1979 = vrot.lane.b32.xlu0 %v1631, 48
        %v1980 = vpop.permute.xlu0 %1979
        %1981 = vrot.lane.b32.xlu0 %v1633, 48
        %v1982 = vpop.permute.xlu0 %1981
        %1983 = vrot.lane.b32.xlu0 %v1635, 48
        %v1984 = vpop.permute.xlu0 %1983
        %1985 = vrot.lane.b32.xlu0 %v1639, 48
        %v1986 = vpop.permute.xlu0 %1985
        %1987 = vrot.lane.b32.xlu0 %v1641, 48
        %v1988 = vpop.permute.xlu0 %1987
        %1989 = vrot.lane.b32.xlu0 %v1643, 48
        %v1990 = vpop.permute.xlu0 %1989
        %1991 = vrot.lane.b32.xlu0 %v1645, 48
        %v1992 = vpop.permute.xlu0 %1991
        %vm1993 = vcmask 392192
        %v1994 = vsel %vm1993, %v1970, %v1972
        %v1995 = vsel %vm1993, %v1974, %v1976
        %v1996 = vsel %vm1993, %v1978, %v1980
        %v1997 = vsel %vm1993, %v1982, %v1984
        %v1998 = vsel %vm1993, %v1986, %v1988
        %v1999 = vsel %vm1993, %v1990, %v1992
        %v2006 = vmax.f32 %v1619, %v1994
        %v2007 = vmax.f32 %v1623, %v1995
        %v2008 = vmax.f32 %v1629, %v1996
        %v2009 = vmax.f32 %v1633, %v1997
        %v2010 = vmax.f32 %v1639, %v1998
        %v2011 = vmax.f32 %v1643, %v1999
        %2024 = vrot.lane.b32.xlu0 %v1929, 48
        %v2025 = vpop.permute.xlu0 %2024
        %2026 = vrot.lane.b32.xlu0 %v1931, 48
        %v2027 = vpop.permute.xlu0 %2026
        %2028 = vrot.lane.b32.xlu0 %v1933, 48
        %v2029 = vpop.permute.xlu0 %2028
        %2030 = vrot.lane.b32.xlu0 %v1935, 48
        %v2031 = vpop.permute.xlu0 %2030
        %2032 = vrot.lane.b32.xlu0 %v1939, 48
        %v2033 = vpop.permute.xlu0 %2032
        %2034 = vrot.lane.b32.xlu0 %v1941, 48
        %v2035 = vpop.permute.xlu0 %2034
        %2036 = vrot.lane.b32.xlu0 %v1943, 48
        %v2037 = vpop.permute.xlu0 %2036
        %2038 = vrot.lane.b32.xlu0 %v1945, 48
        %v2039 = vpop.permute.xlu0 %2038
        %2040 = vrot.lane.b32.xlu0 %v1949, 48
        %v2041 = vpop.permute.xlu0 %2040
        %2042 = vrot.lane.b32.xlu0 %v1951, 48
        %v2043 = vpop.permute.xlu0 %2042
        %2044 = vrot.lane.b32.xlu0 %v1953, 48
        %v2045 = vpop.permute.xlu0 %2044
        %2046 = vrot.lane.b32.xlu0 %v1955, 48
        %v2047 = vpop.permute.xlu0 %2046
        %v2048 = vsel %vm1993, %v2025, %v2027
        %v2049 = vsel %vm1993, %v2029, %v2031
        %v2050 = vsel %vm1993, %v2033, %v2035
        %v2051 = vsel %vm1993, %v2037, %v2039
        %v2052 = vsel %vm1993, %v2041, %v2043
        %v2053 = vsel %vm1993, %v2045, %v2047
        %v2060 = vmax.f32 %v1929, %v2048
        %v2061 = vmax.f32 %v1933, %v2049
        %v2062 = vmax.f32 %v1939, %v2050
        %v2063 = vmax.f32 %v1943, %v2051
        %v2064 = vmax.f32 %v1949, %v2052
        %v2065 = vmax.f32 %v1953, %v2053
        %v2066 = vmax.f32 %v2006, %v2060
        %v2067 = vmax.f32 %v2007, %v2061
        %v2068 = vmax.f32 %v2008, %v2062
        %v2069 = vmax.f32 %v2009, %v2063
        %v2070 = vmax.f32 %v2010, %v2064
        %v2071 = vmax.f32 %v2011, %v2065
        %v2072 = vld [vmem:[%s4] sm:$0x1]
        %v2074 = vlaneseq
        %v2075 = vshrl.u32 %v2074, 7
        %v2076 = vsub.s32 0, %v2075
        %v2077 = vrot.slane %v2072, %v2076
        %v2079 = vadd.f32 %v2066, %v2077
        %v2080 = vadd.f32 %v2067, %v2077
        %v2081 = vadd.f32 %v2068, %v2077
        %v2082 = vadd.f32 %v2069, %v2077
        %v2083 = vadd.f32 %v2070, %v2077
        %v2084 = vadd.f32 %v2071, %v2077
        %v2085 = vmax.f32 %v2079, 0.0
        %v2086 = vmax.f32 %v2080, 0.0
        %v2087 = vmax.f32 %v2081, 0.0
        %v2088 = vmax.f32 %v2082, 0.0
        %v2089 = vmax.f32 %v2083, 0.0
        %v2090 = vmax.f32 %v2084, 0.0
        %v2091 = vpack.c.bf16 %v2086, %v2085
        %v2092 = vpack.c.bf16 %v2088, %v2087
        %v2093 = vpack.c.bf16 %v2090, %v2089
        %v2097 = vrot.slane %v2091, 1
        %v2098 = vrot.slane %v2092, 1
        %v2099 = vsel %vm912, %v2097, %v2098
        %v2100 = vrot.slane %v2093, 1
        %v2101 = vsel %vm912, %v2098, %v2100
        %2102 = vrot.lane.b32.xlu0 %v2099, 80
        %v2103 = vpop.permute.xlu0 %2102
        %2104 = vrot.lane.b32.xlu0 %v2101, 80
        %v2105 = vpop.permute.xlu0 %2104
        %2106 = vrot.lane.b32.xlu0 %v2100, 80
        %v2107 = vpop.permute.xlu0 %2106
        %v2108 = vrot.slane %v2091, 2
        %v2109 = vrot.slane %v2092, 2
        %v2110 = vsel %vm942, %v2108, %v2109
        %v2111 = vrot.slane %v2093, 2
        %v2112 = vsel %vm942, %v2109, %v2111
        %2113 = vrot.lane.b32.xlu0 %v2110, 32
        %v2114 = vpop.permute.xlu0 %2113
        %2115 = vrot.lane.b32.xlu0 %v2112, 32
        %v2116 = vpop.permute.xlu0 %2115
        %2117 = vrot.lane.b32.xlu0 %v2111, 32
        %v2118 = vpop.permute.xlu0 %2117
        %vm2119 = vcmask 1044480
        %v2120 = vrot.slane %v2091, 3
        %v2121 = vrot.slane %v2092, 3
        %v2122 = vsel %vm2119, %v2120, %v2121
        %v2123 = vrot.slane %v2093, 3
        %v2124 = vsel %vm2119, %v2121, %v2123
        %2125 = vrot.lane.b32.xlu0 %v2122, 112
        %v2126 = vpop.permute.xlu0 %2125
        %2127 = vrot.lane.b32.xlu0 %v2124, 112
        %v2128 = vpop.permute.xlu0 %2127
        %2129 = vrot.lane.b32.xlu0 %v2123, 112
        %v2130 = vpop.permute.xlu0 %2129
        %vm2131 = vcmask 654336
        %v2134 = vsel %vm2131, %v2091, %v2103
        %v2138 = vsel %vm2131, %v2092, %v2105
        %v2142 = vsel %vm2131, %v2093, %v2107
        %vm2144 = vcmask 261120
        %v2146 = vsel %vm2144, %v2103, %v2114
        %v2148 = vsel %vm2144, %v2105, %v2116
        %v2150 = vsel %vm2144, %v2107, %v2118
        %v2152 = vsel %vm964, %v2146, %v2126
        %v2155 = vsel %vm964, %v2148, %v2128
        %v2158 = vsel %vm964, %v2150, %v2130
        %v2160 = vld [vmem:[%s5] sm:$0xf]
        %v2161 = vld [vmem:[%s5 + $0x4] sm:$0xf]
        %v2162 = vld [vmem:[%s5 + $0x8] sm:$0xf]
        %v2163 = vld [vmem:[%s5 + $0xc] sm:$0xf]
        %v2164 = vld [vmem:[%s5 + $0x10] sm:$0xf]
        %v2165 = vld [vmem:[%s5 + $0x14] sm:$0xf]
        %v2166 = vld [vmem:[%s5 + $0x18] sm:$0xf]
        %v2167 = vld [vmem:[%s5 + $0x1c] sm:$0xf]
        %v2168 = vld [vmem:[%s5 + $0x20] sm:$0xf]
        %v2169 = vld [vmem:[%s5 + $0x24] sm:$0xf]
        %v2170 = vld [vmem:[%s5 + $0x28] sm:$0xf]
        %v2171 = vld [vmem:[%s5 + $0x2c] sm:$0xf]
        %v2172 = vld [vmem:[%s5 + $0x30] sm:$0xf]
        %v2173 = vld [vmem:[%s5 + $0x34] sm:$0xf]
        %v2174 = vld [vmem:[%s5 + $0x38] sm:$0xf]
        %v2175 = vld [vmem:[%s5 + $0x3c] sm:$0xf]
        %v2176 = vld [vmem:[%s5 + $0x40] sm:$0xf]
        %v2177 = vld [vmem:[%s5 + $0x44] sm:$0xf]
        %v2178 = vld [vmem:[%s5 + $0x48] sm:$0xf]
        %v2179 = vld [vmem:[%s5 + $0x4c] sm:$0xf]
        %v2180 = vld [vmem:[%s5 + $0x50] sm:$0xf]
        %v2181 = vld [vmem:[%s5 + $0x54] sm:$0xf]
        %v2182 = vld [vmem:[%s5 + $0x58] sm:$0xf]
        %v2183 = vld [vmem:[%s5 + $0x5c] sm:$0xf]
        %v2184 = vld [vmem:[%s5 + $0x60] sm:$0xf]
        %v2185 = vld [vmem:[%s5 + $0x64] sm:$0xf]
        %v2186 = vld [vmem:[%s5 + $0x68] sm:$0xf]
        %v2187 = vld [vmem:[%s5 + $0x6c] sm:$0xf]
        %v2188 = vld [vmem:[%s5 + $0x70] sm:$0xf]
        %v2189 = vld [vmem:[%s5 + $0x74] sm:$0xf]
        %v2190 = vld [vmem:[%s5 + $0x78] sm:$0xf]
        %v2191 = vld [vmem:[%s5 + $0x7c] sm:$0xf]
        %v2192 = vld [vmem:[%s5 + $0x80] sm:$0xf]
        %v2193 = vld [vmem:[%s5 + $0x84] sm:$0xf]
        %v2194 = vld [vmem:[%s5 + $0x88] sm:$0xf]
        %v2195 = vld [vmem:[%s5 + $0x8c] sm:$0xf]
        %v2196 = vld [vmem:[%s5 + $0x90] sm:$0xf]
        %v2197 = vld [vmem:[%s5 + $0x94] sm:$0xf]
        %v2198 = vld [vmem:[%s5 + $0x98] sm:$0xf]
        %v2199 = vld [vmem:[%s5 + $0x9c] sm:$0xf]
        %v2200 = vld [vmem:[%s6] sm:$0x1]
        %v2202 = vlaneseq
        %v2203 = vshrl.u32 %v2202, 7
        %v2204 = vsub.s32 0, %v2203
        %v2205 = vrot.slane %v2200, %v2204
        %v2247 = vunpack.c.l.b16 %v2160
        %v2248 = vunpack.c.l.b16 %v2161
        %v2249 = vunpack.c.l.b16 %v2162
        %v2250 = vunpack.c.l.b16 %v2163
        %v2251 = vunpack.c.l.b16 %v2164
        %v2252 = vunpack.c.l.b16 %v2165
        %v2253 = vunpack.c.l.b16 %v2166
        %v2254 = vunpack.c.l.b16 %v2167
        %v2255 = vunpack.c.l.b16 %v2168
        %v2256 = vunpack.c.l.b16 %v2169
        %v2257 = vunpack.c.l.b16 %v2170
        %v2258 = vunpack.c.l.b16 %v2171
        %v2259 = vunpack.c.l.b16 %v2172
        %v2260 = vunpack.c.l.b16 %v2173
        %v2261 = vunpack.c.l.b16 %v2174
        %v2262 = vunpack.c.l.b16 %v2175
        %v2263 = vunpack.c.l.b16 %v2176
        %v2264 = vunpack.c.l.b16 %v2177
        %v2265 = vunpack.c.l.b16 %v2178
        %v2266 = vunpack.c.l.b16 %v2179
        %v2267 = vunpack.c.l.b16 %v2180
        %v2268 = vunpack.c.l.b16 %v2181
        %v2269 = vunpack.c.l.b16 %v2182
        %v2270 = vunpack.c.l.b16 %v2183
        %v2271 = vunpack.c.l.b16 %v2184
        %v2272 = vunpack.c.l.b16 %v2185
        %v2273 = vunpack.c.l.b16 %v2186
        %v2274 = vunpack.c.l.b16 %v2187
        %v2275 = vunpack.c.l.b16 %v2188
        %v2276 = vunpack.c.l.b16 %v2189
        %v2277 = vunpack.c.l.b16 %v2190
        %v2278 = vunpack.c.l.b16 %v2191
        %v2279 = vunpack.c.l.b16 %v2192
        %v2280 = vunpack.c.l.b16 %v2193
        %v2281 = vunpack.c.l.b16 %v2194
        %v2282 = vunpack.c.l.b16 %v2195
        %v2283 = vunpack.c.l.b16 %v2196
        %v2284 = vunpack.c.l.b16 %v2197
        %v2285 = vunpack.c.l.b16 %v2198
        %v2286 = vunpack.c.l.b16 %v2199
        %v2287 = vpack.c.b16 %v2248, %v2247
        %v2288 = vpack.c.b16 %v2250, %v2249
        %v2289 = vpack.c.b16 %v2252, %v2251
        %v2290 = vpack.c.b16 %v2254, %v2253
        %v2291 = vpack.c.b16 %v2256, %v2255
        %v2292 = vpack.c.b16 %v2258, %v2257
        %v2293 = vpack.c.b16 %v2260, %v2259
        %v2294 = vpack.c.b16 %v2262, %v2261
        %v2295 = vpack.c.b16 %v2264, %v2263
        %v2296 = vpack.c.b16 %v2266, %v2265
        %v2297 = vpack.c.b16 %v2268, %v2267
        %v2298 = vpack.c.b16 %v2270, %v2269
        %v2299 = vpack.c.b16 %v2272, %v2271
        %v2300 = vpack.c.b16 %v2274, %v2273
        %v2301 = vpack.c.b16 %v2276, %v2275
        %v2302 = vpack.c.b16 %v2278, %v2277
        %v2303 = vpack.c.b16 %v2280, %v2279
        %v2304 = vpack.c.b16 %v2282, %v2281
        %v2305 = vpack.c.b16 %v2284, %v2283
        %v2306 = vpack.c.b16 %v2286, %v2285
        %vm2327 = vcmask 523264
        %v2328 = vsel %vm2327, %v2126, 0
        %v2330 = vsel %vm2327, %v2128, 0
        %v2332 = vsel %vm2327, %v2130, 0
        %2334 = vmatprep.subr.bf16.mxu0 0
        %2335 = vmatpush1.bf16.msra.mxu0 %v2294
        %2336 = vmatprep.subr.bf16.mxu0 0
        %2337 = vmatpush1.bf16.msra.mxu0 %v2293
        %2338 = vmatprep.subr.bf16.mxu0 0
        %2339 = vmatpush1.bf16.msra.mxu0 %v2292
        %2340 = vmatprep.subr.bf16.mxu0 0
        %2341 = vmatpush1.bf16.msra.mxu0 %v2291
        %2342 = vmatprep.subr.bf16.mxu0 0
        %2343 = vmatpush1.bf16.msra.mxu0 %v2290
        %2344 = vmatprep.subr.bf16.mxu0 0
        %2345 = vmatpush1.bf16.msra.mxu0 %v2289
        %2346 = vmatprep.subr.bf16.mxu0 0
        %2347 = vmatpush1.bf16.msra.mxu0 %v2288
        %2348 = vmatprep.subr.bf16.mxu0 0
        %2349 = vmatpush1.bf16.msra.mxu0 %v2287
        %2350 = vmatprep.subr.bf16.mxu0 0
        %2351 = vmatpush2.bf16.msra.mxu0 %v2302
        %2352 = vmatprep.subr.bf16.mxu0 0
        %2353 = vmatpush2.bf16.msra.mxu0 %v2301
        %2354 = vmatprep.subr.bf16.mxu0 0
        %2355 = vmatpush2.bf16.msra.mxu0 %v2300
        %2356 = vmatprep.subr.bf16.mxu0 0
        %2357 = vmatpush2.bf16.msra.mxu0 %v2299
        %2358 = vmatprep.subr.bf16.mxu0 0
        %2359 = vmatpush2.bf16.msra.mxu0 %v2298
        %2360 = vmatprep.subr.bf16.mxu0 0
        %2361 = vmatpush2.bf16.msra.mxu0 %v2297
        %2362 = vmatprep.subr.bf16.mxu0 0
        %2363 = vmatpush2.bf16.msra.mxu0 %v2296
        %2364 = vmatprep.subr.bf16.mxu0 0
        %2365 = vmatpush2.bf16.msra.mxu0 %v2295
        %2366 = vmatprep.mubr.bf16.mxu0 %v2152
        %2367 = vmatmul.mubr.bf16.gmra.mxu0 %v2134
        %v2368 = vpop.f32.mrf.mxu0
        %v2369 = vadd.f32 %v2205, %v2368
        %v2370 = vpop.f32.mrf.mxu0
        %v2371 = vpop.f32.mrf.mxu0
        %v2372 = vadd.f32 %v2205, %v2371
        %v2373 = vpop.f32.mrf.mxu0
        %2374 = vmatprep.mubr.bf16.mxu0 %v2155
        %2375 = vmatmul.mubr.bf16.gmra.mxu0 %v2138
        %v2376 = vpop.f32.mrf.mxu0
        %v2377 = vadd.f32 %v2205, %v2376
        %v2378 = vpop.f32.mrf.mxu0
        %v2379 = vpop.f32.mrf.mxu0
        %v2380 = vadd.f32 %v2205, %v2379
        %v2381 = vpop.f32.mrf.mxu0
        %2382 = vmatprep.mubr.bf16.mxu0 %v2158
        %2383 = vmatmul.mubr.bf16.gmra.mxu0 %v2142
        %v2384 = vpop.f32.mrf.mxu0
        %v2385 = vadd.f32 %v2205, %v2384
        %v2386 = vpop.f32.mrf.mxu0
        %v2387 = vpop.f32.mrf.mxu0
        %v2388 = vpop.f32.mrf.mxu0
        %2389 = vdwg.mxu0
        %2390 = vmatprep.subr.bf16.mxu0 0
        %2391 = vmatpush1.bf16.msra.mxu0 0
        %2392 = vmatprep.subr.bf16.mxu0 0
        %2393 = vmatpush1.bf16.msra.mxu0 0
        %2394 = vmatprep.subr.bf16.mxu0 0
        %2395 = vmatpush1.bf16.msra.mxu0 0
        %2396 = vmatprep.subr.bf16.mxu0 0
        %2397 = vmatpush1.bf16.msra.mxu0 0
        %2398 = vmatprep.subr.bf16.mxu0 0
        %2399 = vmatpush1.bf16.msra.mxu0 %v2306
        %2400 = vmatprep.subr.bf16.mxu0 0
        %2401 = vmatpush1.bf16.msra.mxu0 %v2305
        %2402 = vmatprep.subr.bf16.mxu0 0
        %2403 = vmatpush1.bf16.msra.mxu0 %v2304
        %2404 = vmatprep.subr.bf16.mxu0 0
        %2405 = vmatpush1.bf16.msra.mxu0 %v2303
        %2406 = vmatprep.subr.bf16.mxu0 0
        %2407 = vmatpush2.bf16.msra.mxu0 0
        %2408 = vmatprep.subr.bf16.mxu0 0
        %2409 = vmatpush2.bf16.msra.mxu0 0
        %2410 = vmatprep.subr.bf16.mxu0 0
        %2411 = vmatpush2.bf16.msra.mxu0 0
        %2412 = vmatprep.subr.bf16.mxu0 0
        %2413 = vmatpush2.bf16.msra.mxu0 0
        %2414 = vmatprep.subr.bf16.mxu0 0
        %2415 = vmatpush2.bf16.msra.mxu0 0
        %2416 = vmatprep.subr.bf16.mxu0 0
        %2417 = vmatpush2.bf16.msra.mxu0 0
        %2418 = vmatprep.subr.bf16.mxu0 0
        %2419 = vmatpush2.bf16.msra.mxu0 0
        %2420 = vmatprep.subr.bf16.mxu0 0
        %2421 = vmatpush2.bf16.msra.mxu0 0
        %2422 = vmatprep.mubr.bf16.mxu0 0
        %2423 = vmatmul.mubr.bf16.gmra.mxu0 %v2328
        %v2424 = vpop.f32.mrf.mxu0
        %v2425 = vadd.f32 %v2369, %v2424
        %v2426 = vpop.f32.mrf.mxu0
        %v2427 = vpop.f32.mrf.mxu0
        %v2428 = vadd.f32 %v2372, %v2427
        %v2429 = vpop.f32.mrf.mxu0
        %2430 = vmatprep.mubr.bf16.mxu0 0
        %2431 = vmatmul.mubr.bf16.gmra.mxu0 %v2330
        %v2432 = vpop.f32.mrf.mxu0
        %v2433 = vadd.f32 %v2377, %v2432
        %v2434 = vpop.f32.mrf.mxu0
        %v2435 = vpop.f32.mrf.mxu0
        %v2436 = vadd.f32 %v2380, %v2435
        %v2437 = vpop.f32.mrf.mxu0
        %2438 = vmatprep.mubr.bf16.mxu0 0
        %2439 = vmatmul.mubr.bf16.gmra.mxu0 %v2332
        %v2440 = vpop.f32.mrf.mxu0
        %v2441 = vadd.f32 %v2385, %v2440
        %v2442 = vpop.f32.mrf.mxu0
        %v2443 = vpop.f32.mrf.mxu0
        %v2444 = vpop.f32.mrf.mxu0
        %2445 = vdwg.mxu0
        %v2446 = vmax.f32 %v2425, 0.0
        %v2447 = vmax.f32 %v2428, 0.0
        %v2448 = vmax.f32 %v2433, 0.0
        %v2449 = vmax.f32 %v2436, 0.0
        %v2450 = vmax.f32 %v2441, 0.0
        %v2451 = vpack.c.bf16 %v2447, %v2446
        %v2452 = vpack.c.bf16 %v2449, %v2448
        %v2453 = vpack.c.bf16 %v2450, %v2450
        %v2454 = vld [vmem:[%s7] sm:$0xf]
        %v2455 = vld [vmem:[%s7 + $0x4] sm:$0xf]
        %v2456 = vld [vmem:[%s7 + $0x8] sm:$0xf]
        %v2457 = vld [vmem:[%s7 + $0xc] sm:$0xf]
        %v2458 = vld [vmem:[%s7 + $0x10] sm:$0xf]
        %v2459 = vld [vmem:[%s7 + $0x14] sm:$0xf]
        %v2460 = vld [vmem:[%s7 + $0x18] sm:$0xf]
        %v2461 = vld [vmem:[%s7 + $0x1c] sm:$0xf]
        %v2462 = vld [vmem:[%s8] sm:$0x1]
        %v2464 = vlaneseq
        %v2465 = vshrl.u32 %v2464, 7
        %v2466 = vsub.s32 0, %v2465
        %v2467 = vrot.slane %v2462, %v2466
        %v2477 = vunpack.c.l.b16 %v2454
        %v2478 = vunpack.c.l.b16 %v2455
        %v2479 = vunpack.c.l.b16 %v2456
        %v2480 = vunpack.c.l.b16 %v2457
        %v2481 = vunpack.c.l.b16 %v2458
        %v2482 = vunpack.c.l.b16 %v2459
        %v2483 = vunpack.c.l.b16 %v2460
        %v2484 = vunpack.c.l.b16 %v2461
        %v2485 = vpack.c.b16 %v2478, %v2477
        %v2486 = vpack.c.b16 %v2480, %v2479
        %v2487 = vpack.c.b16 %v2482, %v2481
        %v2488 = vpack.c.b16 %v2484, %v2483
        %v2494 = vsel %vm2327, %v2451, 0
        %v2497 = vsel %vm2327, %v2452, 0
        %v2500 = vsel %vm2327, %v2453, 0
        %2502 = vmatprep.subr.bf16.mxu0 0
        %2503 = vmatpush1.bf16.msra.mxu0 0
        %2504 = vmatprep.subr.bf16.mxu0 0
        %2505 = vmatpush1.bf16.msra.mxu0 0
        %2506 = vmatprep.subr.bf16.mxu0 0
        %2507 = vmatpush1.bf16.msra.mxu0 0
        %2508 = vmatprep.subr.bf16.mxu0 0
        %2509 = vmatpush1.bf16.msra.mxu0 0
        %2510 = vmatprep.subr.bf16.mxu0 0
        %2511 = vmatpush1.bf16.msra.mxu0 %v2488
        %2512 = vmatprep.subr.bf16.mxu0 0
        %2513 = vmatpush1.bf16.msra.mxu0 %v2487
        %2514 = vmatprep.subr.bf16.mxu0 0
        %2515 = vmatpush1.bf16.msra.mxu0 %v2486
        %2516 = vmatprep.subr.bf16.mxu0 0
        %2517 = vmatpush1.bf16.msra.mxu0 %v2485
        %2518 = vmatprep.subr.bf16.mxu0 0
        %2519 = vmatpush2.bf16.msra.mxu0 0
        %2520 = vmatprep.subr.bf16.mxu0 0
        %2521 = vmatpush2.bf16.msra.mxu0 0
        %2522 = vmatprep.subr.bf16.mxu0 0
        %2523 = vmatpush2.bf16.msra.mxu0 0
        %2524 = vmatprep.subr.bf16.mxu0 0
        %2525 = vmatpush2.bf16.msra.mxu0 0
        %2526 = vmatprep.subr.bf16.mxu0 0
        %2527 = vmatpush2.bf16.msra.mxu0 0
        %2528 = vmatprep.subr.bf16.mxu0 0
        %2529 = vmatpush2.bf16.msra.mxu0 0
        %2530 = vmatprep.subr.bf16.mxu0 0
        %2531 = vmatpush2.bf16.msra.mxu0 0
        %2532 = vmatprep.subr.bf16.mxu0 0
        %2533 = vmatpush2.bf16.msra.mxu0 0
        %2534 = vmatprep.mubr.bf16.mxu0 0
        %2535 = vmatmul.mubr.bf16.gmra.mxu0 %v2494
        %v2536 = vpop.f32.mrf.mxu0
        %v2537 = vadd.f32 %v2467, %v2536
        %v2538 = vpop.f32.mrf.mxu0
        %v2539 = vpop.f32.mrf.mxu0
        %v2540 = vadd.f32 %v2467, %v2539
        %v2541 = vpop.f32.mrf.mxu0
        %2542 = vmatprep.mubr.bf16.mxu0 0
        %2543 = vmatmul.mubr.bf16.gmra.mxu0 %v2497
        %v2544 = vpop.f32.mrf.mxu0
        %v2545 = vadd.f32 %v2467, %v2544
        %v2546 = vpop.f32.mrf.mxu0
        %v2547 = vpop.f32.mrf.mxu0
        %v2548 = vadd.f32 %v2467, %v2547
        %v2549 = vpop.f32.mrf.mxu0
        %2550 = vmatprep.mubr.bf16.mxu0 0
        %2551 = vmatmul.mubr.bf16.gmra.mxu0 %v2500
        %v2552 = vpop.f32.mrf.mxu0
        %v2553 = vadd.f32 %v2467, %v2552
        %v2554 = vpop.f32.mrf.mxu0
        %v2555 = vpop.f32.mrf.mxu0
        %v2556 = vpop.f32.mrf.mxu0
        %2557 = vdwg.mxu0
        %v2558 = vmax.f32 %v2537, 0.0
        %v2559 = vmax.f32 %v2540, 0.0
        %v2560 = vmax.f32 %v2545, 0.0
        %v2561 = vmax.f32 %v2548, 0.0
        %v2562 = vmax.f32 %v2553, 0.0
        %vm2563 = vcmask 1044480
        %v2564 = vsel %vm2563, %v2562, 0.0
        %2565 = vst [vmem:[%s414] sm:$0xff] %v2558
        %2566 = vst [vmem:[%s414 + $0x8] sm:$0xff] %v2559
        %2567 = vst [vmem:[%s414 + $0x10] sm:$0xff] %v2560
        %2568 = vst [vmem:[%s414 + $0x18] sm:$0xff] %v2561
        %2569 = vst [vmem:[%s414 + $0x20] sm:$0xff] %v2564
        %2570 = vst [vmem:[%s414 + $0x28] sm:$0xff] 0.0
        %s2571 = smul.u32 6, %s20
        %p2572 = scmp.lt.s32.totalorder %s2571, 11
        %s2573 = scalar_select %p2572, %s2571, 11
        %s2574 = smul.addr %s2573, 8
        %s2575 = scalar_lea.vmem %s9, %s2574
        // Predicated region
        $region95: #{cnn_forward.1} parent=89 // pred_check
          %p2576 = pneg %p232
        $region96: #{cnn_forward.1} parent=89 // pred_check_branch
          %2578 = sbr.rel (%p2576) target = $region98
        $region97: #{cnn_forward.1} parent=89 // pred_region
          %s2579 = smul.u32 6, %s20
        $region98: #{cnn_forward.1} parent=89 // pred_fallthru
          _
      $region90: #{cnn_forward.1} parent=5 // pred_fallthru
        _
      %p2580 = scmp.le.s32.totalorder 2, %s15
      // Predicated region
      $region99: #{cnn_forward.1} parent=5 // pred_check
        %p2581 = pneg %p2580
      $region100: #{cnn_forward.1} parent=5 // pred_check_branch
        %2583 = sbr.rel (%p2581) target = $region102
      $region101: #{cnn_forward.1} parent=5 // pred_region
        %s2584 = ssub.s32 %s15, 2
        // Predicated region
        $region103: #{cnn_forward.1} parent=101 // pred_check
          %p2585 = pneg %p238
        $region104: #{cnn_forward.1} parent=101 // pred_check_branch
          %2587 = sbr.rel (%p2585) target = $region106
        $region105: #{cnn_forward.1} parent=101 // pred_region
          %s2588 = smul.u32 6, %s21
          %p2589 = scmp.lt.s32.totalorder %s2588, 11
          %s2590 = scalar_select %p2589, %s2588, 11
          %s2591 = smul.addr %s2590, 8
          %s2592 = scalar_lea.vmem %s9, %s2591
        $region106: #{cnn_forward.1} parent=101 // pred_fallthru
          _
      $region102: #{cnn_forward.1} parent=5 // pred_fallthru
        _
    $region6: #{cnn_forward.1} parent=1 // loop_footer
      %s19 = sadd.s32 1, %s15
    $region7: #{cnn_forward.1} parent=1 // loop_footer_branch
      %14 = sbr.rel target = $region3
    $region8: #{cnn_forward.1} parent=1 // loop_exit
      _

</llo_original>
